<compile_context>
chip_gen: v5e
topology: v5e:2x2
jax: 0.10.0
libtpu: 0.0.40
codegen_flags: <defaults>
</compile_context>

<pallas_src>
import functools

import numpy as np
import jax
import jax.numpy as jnp
from jax.experimental import pallas as pl
from jax.experimental.pallas import tpu as pltpu

EPS = 1e-5
LANES = 128


# ---------------------------------------------------------------------------
# The single fused Pallas kernel
# ---------------------------------------------------------------------------
def fused_cnn_kernel(x_ref, gm_ref, sel_ref, w1_ref, w2_ref, wf1_ref, wf2_ref,
                     bn_ref, fcb_ref, out_ref, *, m_valid):
    # x_ref   : [Mp, Cin]      rows = (b, h, w), rows >= m_valid are zero padding
    # gm_ref  : [9, Mp, Mp]    constant shift + zero-pad-mask matrices (per 3x3 tap)
    # sel_ref : [HW, B, Mp]    constant row-selection matrices (flatten gather)
    # w1_ref  : [9, Cin, C1]   conv1 weights per tap
    # w2_ref  : [9, C1, C2]    conv2 weights per tap
    # wf1_ref : [HW, C2, HF]   fc1 weights, torch flatten order folded in
    # wf2_ref : [HF, 128]      fc2 weights, zero-padded to 128 lanes
    # bn_ref  : [4, C2]        rows: bn1_g, bn1_b, bn2_g, bn2_b (bn1 padded)
    # fcb_ref : [2, 128]       rows: fc1_b (padded), fc2_b (padded)
    # out_ref : [B, 128]       lane-dense output slab; cols >= 3 are garbage/zero
    mp = x_ref.shape[0]
    rows = jax.lax.broadcasted_iota(jnp.int32, (mp, 1), 0)
    rv = (rows < m_valid).astype(jnp.float32)          # valid-row mask
    inv_m = jnp.float32(1.0 / m_valid)

    def conv_bn_relu(x, w_ref, gamma, beta):
        cout = w_ref.shape[2]
        acc = jnp.zeros((mp, cout), jnp.float32)
        for k in range(9):                              # 3x3 taps, unrolled
            xw = jnp.dot(x, w_ref[k], preferred_element_type=jnp.float32)
            acc = acc + jnp.dot(gm_ref[k], xw, preferred_element_type=jnp.float32)
        # training-mode BatchNorm over the m_valid real rows (pad rows of acc are 0)
        mean = jnp.sum(acc, axis=0, keepdims=True) * inv_m
        diff = (acc - mean) * rv
        var = jnp.sum(diff * diff, axis=0, keepdims=True) * inv_m   # biased, centered
        yhat = diff * jax.lax.rsqrt(var + EPS)
        return jnp.maximum(gamma * yhat + beta, 0.0) * rv

    x = x_ref[...]
    c1 = w1_ref.shape[2]
    c2 = w2_ref.shape[2]
    y1 = conv_bn_relu(x, w1_ref, bn_ref[0:1, 0:c1], bn_ref[1:2, 0:c1])   # [Mp, C1]
    y2 = conv_bn_relu(y1, w2_ref, bn_ref[2:3, 0:c2], bn_ref[3:4, 0:c2])  # [Mp, C2]

    # flatten (torch NCHW order folded into wf1) + fc1 + relu
    hw_n = sel_ref.shape[0]
    bsz = sel_ref.shape[1]
    hf = wf1_ref.shape[2]
    h1 = jnp.zeros((bsz, hf), jnp.float32)
    for k in range(hw_n):
        picked = jnp.dot(sel_ref[k], y2, preferred_element_type=jnp.float32)   # [B, C2]
        h1 = h1 + jnp.dot(picked, wf1_ref[k], preferred_element_type=jnp.float32)
    h1 = jnp.maximum(h1 + fcb_ref[0:1, 0:hf], 0.0)

    # fc2 -> lane-dense [B, 128] store
    out_ref[...] = (jnp.dot(h1, wf2_ref[...], preferred_element_type=jnp.float32)
                    + fcb_ref[1:2, :])


def _vmem_spec():
    return pl.BlockSpec(memory_space=pltpu.MemorySpace.VMEM)


# ---------------------------------------------------------------------------
# Wrapper: weight repacking + constant shift/selection matrices, one pallas_call
# ---------------------------------------------------------------------------
def cnn_forward(x_nchw, p):
    B, C, H, W = x_nchw.shape                       # expected (B, 3, 3, 3)
    M = B * H * W
    MP = ((M + 7) // 8) * 8                         # pad rows to a sublane multiple
    C1 = p["conv1_w"].shape[0]                      # 16
    C2 = p["conv2_w"].shape[0]                      # 32
    HF = p["fc1_w"].shape[0]                        # 64
    NOUT = p["fc2_w"].shape[0]                      # 3

    # activations: NCHW -> row-major (b,h,w) x channels, zero-padded rows
    x2d = jnp.transpose(x_nchw, (0, 2, 3, 1)).reshape(M, C)
    x2d = jnp.pad(x2d, ((0, MP - M), (0, 0)))

    # constant 3x3 shift+mask matrices (shared by conv1 and conv2) -- baked constants
    gm = np.zeros((9, MP, MP), np.float32)
    for dy in range(3):
        for dx in range(3):
            k = dy * 3 + dx
            for b in range(B):
                for h in range(H):
                    for w in range(W):
                        hi, wi = h + dy - 1, w + dx - 1
                        if 0 <= hi < H and 0 <= wi < W:
                            gm[k, b * H * W + h * W + w, b * H * W + hi * W + wi] = 1.0
    # constant flatten row-selection matrices: sel[hw, b, :] picks row (b, hw)
    sel = np.zeros((H * W, B, MP), np.float32)
    for hw in range(H * W):
        for b in range(B):
            sel[hw, b, b * H * W + hw] = 1.0

    # conv weights per tap: [kh*kw, Cin, Cout]   (conv biases cancel under BN -> dropped)
    w1s = jnp.transpose(p["conv1_w"], (2, 3, 1, 0)).reshape(9, C, C1)
    w2s = jnp.transpose(p["conv2_w"], (2, 3, 1, 0)).reshape(9, C1, C2)
    # fc1: torch column order is c*(H*W) + h*W + w  ->  [hw, c, out]
    wf1 = jnp.transpose(p["fc1_w"].reshape(HF, C2, H * W), (2, 1, 0))
    # fc2: pad to 128 lanes for a lane-dense output store
    wf2 = jnp.zeros((HF, LANES), jnp.float32).at[:, :NOUT].set(p["fc2_w"].T)

    # packed per-channel BN params and fc biases
    bnp = jnp.zeros((4, C2), jnp.float32)
    bnp = bnp.at[0, :C1].set(p["bn1_g"]).at[1, :C1].set(p["bn1_b"])
    bnp = bnp.at[2, :].set(p["bn2_g"]).at[3, :].set(p["bn2_b"])
    fcb = jnp.zeros((2, LANES), jnp.float32)
    fcb = fcb.at[0, :HF].set(p["fc1_b"]).at[1, :NOUT].set(p["fc2_b"])

    kernel = functools.partial(fused_cnn_kernel, m_valid=M)
    out = pl.pallas_call(
        kernel,
        out_shape=jax.ShapeDtypeStruct((B, LANES), jnp.float32),
        in_specs=[_vmem_spec()] * 9,
        out_specs=_vmem_spec(),
    )(x2d, jnp.asarray(gm), jnp.asarray(sel), w1s, w2s, wf1, wf2, bnp, fcb)
    return out[:, :NOUT]


# ---------------------------------------------------------------------------
# Pure-JAX reference (keeps the conv biases; BN mean-subtraction cancels them)
# ---------------------------------------------------------------------------
def reference_forward(x_nchw, p):
    def conv(x, w, b):
        y = jax.lax.conv_general_dilated(
            x, w, window_strides=(1, 1), padding=((1, 1), (1, 1)),
            dimension_numbers=("NCHW", "OIHW", "NCHW"))
        return y + b[None, :, None, None]

    def bn(x, g, be):
        mean = jnp.mean(x, axis=(0, 2, 3), keepdims=True)
        var = jnp.mean((x - mean) ** 2, axis=(0, 2, 3), keepdims=True)
        return g[None, :, None, None] * (x - mean) / jnp.sqrt(var + EPS) + be[None, :, None, None]

    x = jax.nn.relu(bn(conv(x_nchw, p["conv1_w"], p["conv1_b"]), p["bn1_g"], p["bn1_b"]))
    x = jax.nn.relu(bn(conv(x, p["conv2_w"], p["conv2_b"]), p["bn2_g"], p["bn2_b"]))
    x = x.reshape(x.shape[0], -1)
    x = jax.nn.relu(x @ p["fc1_w"].T + p["fc1_b"])
    return x @ p["fc2_w"].T + p["fc2_b"]


# ---------------------------------------------------------------------------
def init_params(key):
    ks = jax.random.split(key, 8)
    s = 0.1
    return {
        "conv1_w": s * jax.random.normal(ks[0], (16, 3, 3, 3), jnp.float32),
        "conv1_b": s * jax.random.normal(ks[1], (16,), jnp.float32),
        "conv2_w": s * jax.random.normal(ks[2], (32, 16, 3, 3), jnp.float32),
        "conv2_b": s * jax.random.normal(ks[3], (32,), jnp.float32),
        "bn1_g": jnp.ones((16,), jnp.float32),
        "bn1_b": jnp.zeros((16,), jnp.float32),
        "bn2_g": jnp.ones((32,), jnp.float32),
        "bn2_b": jnp.zeros((32,), jnp.float32),
        "fc1_w": s * jax.random.normal(ks[4], (64, 32 * 3 * 3), jnp.float32),
        "fc1_b": s * jax.random.normal(ks[5], (64,), jnp.float32),
        "fc2_w": s * jax.random.normal(ks[6], (3, 64), jnp.float32),
        "fc2_b": s * jax.random.normal(ks[7], (3,), jnp.float32),
    }


if __name__ == "__main__":
    key = jax.random.PRNGKey(0)
    kx, kp = jax.random.split(key)
    params = init_params(kp)
    x = jax.random.normal(kx, (2, 3, 3, 3), jnp.float32)  # NCHW; spatial 3x3 implied by fc1

    out = jax.jit(cnn_forward)(x, params)
    out = jax.block_until_ready(out)

    ref = jax.block_until_ready(reference_forward(x, params))
    assert out.shape == (2, 3)
    assert jnp.allclose(out, ref, atol=2e-4, rtol=2e-4), (out, ref)

    print("KERNEL_OK")
</pallas_src>

<mosaic_0001>
module attributes {stable_mosaic.version = 11 : i64} {
  func.func @fused_cnn_kernel(%arg0: memref<24x3xf32, #tpu.memory_space<vmem>>, %arg1: memref<9x24x24xf32, #tpu.memory_space<vmem>>, %arg2: memref<9x2x24xf32, #tpu.memory_space<vmem>>, %arg3: memref<9x3x16xf32, #tpu.memory_space<vmem>>, %arg4: memref<9x16x32xf32, #tpu.memory_space<vmem>>, %arg5: memref<9x32x64xf32, #tpu.memory_space<vmem>>, %arg6: memref<64x128xf32, #tpu.memory_space<vmem>>, %arg7: memref<4x32xf32, #tpu.memory_space<vmem>>, %arg8: memref<2x128xf32, #tpu.memory_space<vmem>>, %arg9: memref<2x128xf32, #tpu.memory_space<vmem>>) attributes {dimension_semantics = [], scalar_prefetch = 0 : i64, scratch_operands = 0 : i64, tpu.core_type = #tpu.core_type<tc>} {
    %0 = tpu.iota {dimensions = array<i32: 0>} : vector<24x1xi32>
    %c18_i32 = arith.constant 18 : i32
    %1 = vector.broadcast %c18_i32 : i32 to vector<24x1xi32>
    %2 = arith.cmpi slt, %0, %1 : vector<24x1xi32>
    %3 = arith.extui %2 : vector<24x1xi1> to vector<24x1xi32>
    %4 = arith.sitofp %3 : vector<24x1xi32> to vector<24x1xf32>
    %c0 = arith.constant 0 : index
    %c0_0 = arith.constant 0 : index
    %5 = vector.load %arg0[%c0, %c0_0] : memref<24x3xf32, #tpu.memory_space<vmem>>, vector<24x3xf32>
    %c0_1 = arith.constant 0 : index
    %c0_2 = arith.constant 0 : index
    %6 = vector.load %arg7[%c0_1, %c0_2] : memref<4x32xf32, #tpu.memory_space<vmem>>, vector<1x16xf32>
    %c1 = arith.constant 1 : index
    %c0_3 = arith.constant 0 : index
    %7 = vector.load %arg7[%c1, %c0_3] : memref<4x32xf32, #tpu.memory_space<vmem>>, vector<1x16xf32>
    %cst = arith.constant 0.000000e+00 : f32
    %8 = vector.broadcast %cst : f32 to vector<24x16xf32>
    %c0_4 = arith.constant 0 : index
    %c0_5 = arith.constant 0 : index
    %c0_6 = arith.constant 0 : index
    %9 = vector.load %arg3[%c0_4, %c0_5, %c0_6] : memref<9x3x16xf32, #tpu.memory_space<vmem>>, vector<1x3x16xf32>
    %10 = vector.shape_cast %9 : vector<1x3x16xf32> to vector<3x16xf32>
    %cst_7 = arith.constant dense<0.000000e+00> : vector<24x16xf32>
    %11 = tpu.matmul %5, %10, %cst_7 {dimension_numbers = #tpu.dot_dimension_numbers<[1], [0], [0], [1], [0, 0, 1, 1], [], []>} : vector<24x3xf32>, vector<3x16xf32>, vector<24x16xf32> -> vector<24x16xf32>
    %c0_8 = arith.constant 0 : index
    %c0_9 = arith.constant 0 : index
    %c0_10 = arith.constant 0 : index
    %12 = vector.load %arg1[%c0_8, %c0_9, %c0_10] : memref<9x24x24xf32, #tpu.memory_space<vmem>>, vector<1x24x24xf32>
    %13 = vector.shape_cast %12 : vector<1x24x24xf32> to vector<24x24xf32>
    %cst_11 = arith.constant dense<0.000000e+00> : vector<24x16xf32>
    %14 = tpu.matmul %13, %11, %cst_11 {dimension_numbers = #tpu.dot_dimension_numbers<[1], [0], [0], [1], [0, 0, 1, 1], [], []>} : vector<24x24xf32>, vector<24x16xf32>, vector<24x16xf32> -> vector<24x16xf32>
    %15 = arith.addf %8, %14 : vector<24x16xf32>
    %c1_12 = arith.constant 1 : index
    %c0_13 = arith.constant 0 : index
    %c0_14 = arith.constant 0 : index
    %16 = vector.load %arg3[%c1_12, %c0_13, %c0_14] : memref<9x3x16xf32, #tpu.memory_space<vmem>>, vector<1x3x16xf32>
    %17 = vector.shape_cast %16 : vector<1x3x16xf32> to vector<3x16xf32>
    %cst_15 = arith.constant dense<0.000000e+00> : vector<24x16xf32>
    %18 = tpu.matmul %5, %17, %cst_15 {dimension_numbers = #tpu.dot_dimension_numbers<[1], [0], [0], [1], [0, 0, 1, 1], [], []>} : vector<24x3xf32>, vector<3x16xf32>, vector<24x16xf32> -> vector<24x16xf32>
    %c1_16 = arith.constant 1 : index
    %c0_17 = arith.constant 0 : index
    %c0_18 = arith.constant 0 : index
    %19 = vector.load %arg1[%c1_16, %c0_17, %c0_18] : memref<9x24x24xf32, #tpu.memory_space<vmem>>, vector<1x24x24xf32>
    %20 = vector.shape_cast %19 : vector<1x24x24xf32> to vector<24x24xf32>
    %cst_19 = arith.constant dense<0.000000e+00> : vector<24x16xf32>
    %21 = tpu.matmul %20, %18, %cst_19 {dimension_numbers = #tpu.dot_dimension_numbers<[1], [0], [0], [1], [0, 0, 1, 1], [], []>} : vector<24x24xf32>, vector<24x16xf32>, vector<24x16xf32> -> vector<24x16xf32>
    %22 = arith.addf %15, %21 : vector<24x16xf32>
    %c2 = arith.constant 2 : index
    %c0_20 = arith.constant 0 : index
    %c0_21 = arith.constant 0 : index
    %23 = vector.load %arg3[%c2, %c0_20, %c0_21] : memref<9x3x16xf32, #tpu.memory_space<vmem>>, vector<1x3x16xf32>
    %24 = vector.shape_cast %23 : vector<1x3x16xf32> to vector<3x16xf32>
    %cst_22 = arith.constant dense<0.000000e+00> : vector<24x16xf32>
    %25 = tpu.matmul %5, %24, %cst_22 {dimension_numbers = #tpu.dot_dimension_numbers<[1], [0], [0], [1], [0, 0, 1, 1], [], []>} : vector<24x3xf32>, vector<3x16xf32>, vector<24x16xf32> -> vector<24x16xf32>
    %c2_23 = arith.constant 2 : index
    %c0_24 = arith.constant 0 : index
    %c0_25 = arith.constant 0 : index
    %26 = vector.load %arg1[%c2_23, %c0_24, %c0_25] : memref<9x24x24xf32, #tpu.memory_space<vmem>>, vector<1x24x24xf32>
    %27 = vector.shape_cast %26 : vector<1x24x24xf32> to vector<24x24xf32>
    %cst_26 = arith.constant dense<0.000000e+00> : vector<24x16xf32>
    %28 = tpu.matmul %27, %25, %cst_26 {dimension_numbers = #tpu.dot_dimension_numbers<[1], [0], [0], [1], [0, 0, 1, 1], [], []>} : vector<24x24xf32>, vector<24x16xf32>, vector<24x16xf32> -> vector<24x16xf32>
    %29 = arith.addf %22, %28 : vector<24x16xf32>
    %c3 = arith.constant 3 : index
    %c0_27 = arith.constant 0 : index
    %c0_28 = arith.constant 0 : index
    %30 = vector.load %arg3[%c3, %c0_27, %c0_28] : memref<9x3x16xf32, #tpu.memory_space<vmem>>, vector<1x3x16xf32>
    %31 = vector.shape_cast %30 : vector<1x3x16xf32> to vector<3x16xf32>
    %cst_29 = arith.constant dense<0.000000e+00> : vector<24x16xf32>
    %32 = tpu.matmul %5, %31, %cst_29 {dimension_numbers = #tpu.dot_dimension_numbers<[1], [0], [0], [1], [0, 0, 1, 1], [], []>} : vector<24x3xf32>, vector<3x16xf32>, vector<24x16xf32> -> vector<24x16xf32>
    %c3_30 = arith.constant 3 : index
    %c0_31 = arith.constant 0 : index
    %c0_32 = arith.constant 0 : index
    %33 = vector.load %arg1[%c3_30, %c0_31, %c0_32] : memref<9x24x24xf32, #tpu.memory_space<vmem>>, vector<1x24x24xf32>
    %34 = vector.shape_cast %33 : vector<1x24x24xf32> to vector<24x24xf32>
    %cst_33 = arith.constant dense<0.000000e+00> : vector<24x16xf32>
    %35 = tpu.matmul %34, %32, %cst_33 {dimension_numbers = #tpu.dot_dimension_numbers<[1], [0], [0], [1], [0, 0, 1, 1], [], []>} : vector<24x24xf32>, vector<24x16xf32>, vector<24x16xf32> -> vector<24x16xf32>
    %36 = arith.addf %29, %35 : vector<24x16xf32>
    %c4 = arith.constant 4 : index
    %c0_34 = arith.constant 0 : index
    %c0_35 = arith.constant 0 : index
    %37 = vector.load %arg3[%c4, %c0_34, %c0_35] : memref<9x3x16xf32, #tpu.memory_space<vmem>>, vector<1x3x16xf32>
    %38 = vector.shape_cast %37 : vector<1x3x16xf32> to vector<3x16xf32>
    %cst_36 = arith.constant dense<0.000000e+00> : vector<24x16xf32>
    %39 = tpu.matmul %5, %38, %cst_36 {dimension_numbers = #tpu.dot_dimension_numbers<[1], [0], [0], [1], [0, 0, 1, 1], [], []>} : vector<24x3xf32>, vector<3x16xf32>, vector<24x16xf32> -> vector<24x16xf32>
    %c4_37 = arith.constant 4 : index
    %c0_38 = arith.constant 0 : index
    %c0_39 = arith.constant 0 : index
    %40 = vector.load %arg1[%c4_37, %c0_38, %c0_39] : memref<9x24x24xf32, #tpu.memory_space<vmem>>, vector<1x24x24xf32>
    %41 = vector.shape_cast %40 : vector<1x24x24xf32> to vector<24x24xf32>
    %cst_40 = arith.constant dense<0.000000e+00> : vector<24x16xf32>
    %42 = tpu.matmul %41, %39, %cst_40 {dimension_numbers = #tpu.dot_dimension_numbers<[1], [0], [0], [1], [0, 0, 1, 1], [], []>} : vector<24x24xf32>, vector<24x16xf32>, vector<24x16xf32> -> vector<24x16xf32>
    %43 = arith.addf %36, %42 : vector<24x16xf32>
    %c5 = arith.constant 5 : index
    %c0_41 = arith.constant 0 : index
    %c0_42 = arith.constant 0 : index
    %44 = vector.load %arg3[%c5, %c0_41, %c0_42] : memref<9x3x16xf32, #tpu.memory_space<vmem>>, vector<1x3x16xf32>
    %45 = vector.shape_cast %44 : vector<1x3x16xf32> to vector<3x16xf32>
    %cst_43 = arith.constant dense<0.000000e+00> : vector<24x16xf32>
    %46 = tpu.matmul %5, %45, %cst_43 {dimension_numbers = #tpu.dot_dimension_numbers<[1], [0], [0], [1], [0, 0, 1, 1], [], []>} : vector<24x3xf32>, vector<3x16xf32>, vector<24x16xf32> -> vector<24x16xf32>
    %c5_44 = arith.constant 5 : index
    %c0_45 = arith.constant 0 : index
    %c0_46 = arith.constant 0 : index
    %47 = vector.load %arg1[%c5_44, %c0_45, %c0_46] : memref<9x24x24xf32, #tpu.memory_space<vmem>>, vector<1x24x24xf32>
    %48 = vector.shape_cast %47 : vector<1x24x24xf32> to vector<24x24xf32>
    %cst_47 = arith.constant dense<0.000000e+00> : vector<24x16xf32>
    %49 = tpu.matmul %48, %46, %cst_47 {dimension_numbers = #tpu.dot_dimension_numbers<[1], [0], [0], [1], [0, 0, 1, 1], [], []>} : vector<24x24xf32>, vector<24x16xf32>, vector<24x16xf32> -> vector<24x16xf32>
    %50 = arith.addf %43, %49 : vector<24x16xf32>
    %c6 = arith.constant 6 : index
    %c0_48 = arith.constant 0 : index
    %c0_49 = arith.constant 0 : index
    %51 = vector.load %arg3[%c6, %c0_48, %c0_49] : memref<9x3x16xf32, #tpu.memory_space<vmem>>, vector<1x3x16xf32>
    %52 = vector.shape_cast %51 : vector<1x3x16xf32> to vector<3x16xf32>
    %cst_50 = arith.constant dense<0.000000e+00> : vector<24x16xf32>
    %53 = tpu.matmul %5, %52, %cst_50 {dimension_numbers = #tpu.dot_dimension_numbers<[1], [0], [0], [1], [0, 0, 1, 1], [], []>} : vector<24x3xf32>, vector<3x16xf32>, vector<24x16xf32> -> vector<24x16xf32>
    %c6_51 = arith.constant 6 : index
    %c0_52 = arith.constant 0 : index
    %c0_53 = arith.constant 0 : index
    %54 = vector.load %arg1[%c6_51, %c0_52, %c0_53] : memref<9x24x24xf32, #tpu.memory_space<vmem>>, vector<1x24x24xf32>
    %55 = vector.shape_cast %54 : vector<1x24x24xf32> to vector<24x24xf32>
    %cst_54 = arith.constant dense<0.000000e+00> : vector<24x16xf32>
    %56 = tpu.matmul %55, %53, %cst_54 {dimension_numbers = #tpu.dot_dimension_numbers<[1], [0], [0], [1], [0, 0, 1, 1], [], []>} : vector<24x24xf32>, vector<24x16xf32>, vector<24x16xf32> -> vector<24x16xf32>
    %57 = arith.addf %50, %56 : vector<24x16xf32>
    %c7 = arith.constant 7 : index
    %c0_55 = arith.constant 0 : index
    %c0_56 = arith.constant 0 : index
    %58 = vector.load %arg3[%c7, %c0_55, %c0_56] : memref<9x3x16xf32, #tpu.memory_space<vmem>>, vector<1x3x16xf32>
    %59 = vector.shape_cast %58 : vector<1x3x16xf32> to vector<3x16xf32>
    %cst_57 = arith.constant dense<0.000000e+00> : vector<24x16xf32>
    %60 = tpu.matmul %5, %59, %cst_57 {dimension_numbers = #tpu.dot_dimension_numbers<[1], [0], [0], [1], [0, 0, 1, 1], [], []>} : vector<24x3xf32>, vector<3x16xf32>, vector<24x16xf32> -> vector<24x16xf32>
    %c7_58 = arith.constant 7 : index
    %c0_59 = arith.constant 0 : index
    %c0_60 = arith.constant 0 : index
    %61 = vector.load %arg1[%c7_58, %c0_59, %c0_60] : memref<9x24x24xf32, #tpu.memory_space<vmem>>, vector<1x24x24xf32>
    %62 = vector.shape_cast %61 : vector<1x24x24xf32> to vector<24x24xf32>
    %cst_61 = arith.constant dense<0.000000e+00> : vector<24x16xf32>
    %63 = tpu.matmul %62, %60, %cst_61 {dimension_numbers = #tpu.dot_dimension_numbers<[1], [0], [0], [1], [0, 0, 1, 1], [], []>} : vector<24x24xf32>, vector<24x16xf32>, vector<24x16xf32> -> vector<24x16xf32>
    %64 = arith.addf %57, %63 : vector<24x16xf32>
    %c8 = arith.constant 8 : index
    %c0_62 = arith.constant 0 : index
    %c0_63 = arith.constant 0 : index
    %65 = vector.load %arg3[%c8, %c0_62, %c0_63] : memref<9x3x16xf32, #tpu.memory_space<vmem>>, vector<1x3x16xf32>
    %66 = vector.shape_cast %65 : vector<1x3x16xf32> to vector<3x16xf32>
    %cst_64 = arith.constant dense<0.000000e+00> : vector<24x16xf32>
    %67 = tpu.matmul %5, %66, %cst_64 {dimension_numbers = #tpu.dot_dimension_numbers<[1], [0], [0], [1], [0, 0, 1, 1], [], []>} : vector<24x3xf32>, vector<3x16xf32>, vector<24x16xf32> -> vector<24x16xf32>
    %c8_65 = arith.constant 8 : index
    %c0_66 = arith.constant 0 : index
    %c0_67 = arith.constant 0 : index
    %68 = vector.load %arg1[%c8_65, %c0_66, %c0_67] : memref<9x24x24xf32, #tpu.memory_space<vmem>>, vector<1x24x24xf32>
    %69 = vector.shape_cast %68 : vector<1x24x24xf32> to vector<24x24xf32>
    %cst_68 = arith.constant dense<0.000000e+00> : vector<24x16xf32>
    %70 = tpu.matmul %69, %67, %cst_68 {dimension_numbers = #tpu.dot_dimension_numbers<[1], [0], [0], [1], [0, 0, 1, 1], [], []>} : vector<24x24xf32>, vector<24x16xf32>, vector<24x16xf32> -> vector<24x16xf32>
    %71 = arith.addf %64, %70 : vector<24x16xf32>
    %cst_69 = arith.constant dense<0.000000e+00> : vector<16xf32>
    %72 = vector.multi_reduction <add>, %71, %cst_69 [0] : vector<24x16xf32> to vector<16xf32>
    %73 = vector.shape_cast %72 : vector<16xf32> to vector<1x16xf32>
    %cst_70 = arith.constant 0.055555556 : f32
    %74 = vector.broadcast %cst_70 : f32 to vector<1x16xf32>
    %75 = arith.mulf %73, %74 : vector<1x16xf32>
    %76 = vector.broadcast %75 : vector<1x16xf32> to vector<24x16xf32>
    %77 = arith.subf %71, %76 : vector<24x16xf32>
    %78 = vector.broadcast %4 : vector<24x1xf32> to vector<24x16xf32>
    %79 = arith.mulf %77, %78 : vector<24x16xf32>
    %80 = arith.mulf %79, %79 : vector<24x16xf32>
    %cst_71 = arith.constant dense<0.000000e+00> : vector<16xf32>
    %81 = vector.multi_reduction <add>, %80, %cst_71 [0] : vector<24x16xf32> to vector<16xf32>
    %82 = vector.shape_cast %81 : vector<16xf32> to vector<1x16xf32>
    %cst_72 = arith.constant 0.055555556 : f32
    %83 = vector.broadcast %cst_72 : f32 to vector<1x16xf32>
    %84 = arith.mulf %82, %83 : vector<1x16xf32>
    %cst_73 = arith.constant 9.99999974E-6 : f32
    %85 = vector.broadcast %cst_73 : f32 to vector<1x16xf32>
    %86 = arith.addf %84, %85 : vector<1x16xf32>
    %87 = math.rsqrt %86 : vector<1x16xf32>
    %88 = vector.broadcast %87 : vector<1x16xf32> to vector<24x16xf32>
    %89 = arith.mulf %79, %88 : vector<24x16xf32>
    %90 = vector.broadcast %6 : vector<1x16xf32> to vector<24x16xf32>
    %91 = arith.mulf %90, %89 : vector<24x16xf32>
    %92 = vector.broadcast %7 : vector<1x16xf32> to vector<24x16xf32>
    %93 = arith.addf %91, %92 : vector<24x16xf32>
    %cst_74 = arith.constant 0.000000e+00 : f32
    %94 = vector.broadcast %cst_74 : f32 to vector<24x16xf32>
    %95 = arith.maximumf %93, %94 : vector<24x16xf32>
    %96 = vector.broadcast %4 : vector<24x1xf32> to vector<24x16xf32>
    %97 = arith.mulf %95, %96 : vector<24x16xf32>
    %c2_75 = arith.constant 2 : index
    %c0_76 = arith.constant 0 : index
    %98 = vector.load %arg7[%c2_75, %c0_76] : memref<4x32xf32, #tpu.memory_space<vmem>>, vector<1x32xf32>
    %c3_77 = arith.constant 3 : index
    %c0_78 = arith.constant 0 : index
    %99 = vector.load %arg7[%c3_77, %c0_78] : memref<4x32xf32, #tpu.memory_space<vmem>>, vector<1x32xf32>
    %cst_79 = arith.constant 0.000000e+00 : f32
    %100 = vector.broadcast %cst_79 : f32 to vector<24x32xf32>
    %c0_80 = arith.constant 0 : index
    %c0_81 = arith.constant 0 : index
    %c0_82 = arith.constant 0 : index
    %101 = vector.load %arg4[%c0_80, %c0_81, %c0_82] : memref<9x16x32xf32, #tpu.memory_space<vmem>>, vector<1x16x32xf32>
    %102 = vector.shape_cast %101 : vector<1x16x32xf32> to vector<16x32xf32>
    %cst_83 = arith.constant dense<0.000000e+00> : vector<24x32xf32>
    %103 = tpu.matmul %97, %102, %cst_83 {dimension_numbers = #tpu.dot_dimension_numbers<[1], [0], [0], [1], [0, 0, 1, 1], [], []>} : vector<24x16xf32>, vector<16x32xf32>, vector<24x32xf32> -> vector<24x32xf32>
    %c0_84 = arith.constant 0 : index
    %c0_85 = arith.constant 0 : index
    %c0_86 = arith.constant 0 : index
    %104 = vector.load %arg1[%c0_84, %c0_85, %c0_86] : memref<9x24x24xf32, #tpu.memory_space<vmem>>, vector<1x24x24xf32>
    %105 = vector.shape_cast %104 : vector<1x24x24xf32> to vector<24x24xf32>
    %cst_87 = arith.constant dense<0.000000e+00> : vector<24x32xf32>
    %106 = tpu.matmul %105, %103, %cst_87 {dimension_numbers = #tpu.dot_dimension_numbers<[1], [0], [0], [1], [0, 0, 1, 1], [], []>} : vector<24x24xf32>, vector<24x32xf32>, vector<24x32xf32> -> vector<24x32xf32>
    %107 = arith.addf %100, %106 : vector<24x32xf32>
    %c1_88 = arith.constant 1 : index
    %c0_89 = arith.constant 0 : index
    %c0_90 = arith.constant 0 : index
    %108 = vector.load %arg4[%c1_88, %c0_89, %c0_90] : memref<9x16x32xf32, #tpu.memory_space<vmem>>, vector<1x16x32xf32>
    %109 = vector.shape_cast %108 : vector<1x16x32xf32> to vector<16x32xf32>
    %cst_91 = arith.constant dense<0.000000e+00> : vector<24x32xf32>
    %110 = tpu.matmul %97, %109, %cst_91 {dimension_numbers = #tpu.dot_dimension_numbers<[1], [0], [0], [1], [0, 0, 1, 1], [], []>} : vector<24x16xf32>, vector<16x32xf32>, vector<24x32xf32> -> vector<24x32xf32>
    %c1_92 = arith.constant 1 : index
    %c0_93 = arith.constant 0 : index
    %c0_94 = arith.constant 0 : index
    %111 = vector.load %arg1[%c1_92, %c0_93, %c0_94] : memref<9x24x24xf32, #tpu.memory_space<vmem>>, vector<1x24x24xf32>
    %112 = vector.shape_cast %111 : vector<1x24x24xf32> to vector<24x24xf32>
    %cst_95 = arith.constant dense<0.000000e+00> : vector<24x32xf32>
    %113 = tpu.matmul %112, %110, %cst_95 {dimension_numbers = #tpu.dot_dimension_numbers<[1], [0], [0], [1], [0, 0, 1, 1], [], []>} : vector<24x24xf32>, vector<24x32xf32>, vector<24x32xf32> -> vector<24x32xf32>
    %114 = arith.addf %107, %113 : vector<24x32xf32>
    %c2_96 = arith.constant 2 : index
    %c0_97 = arith.constant 0 : index
    %c0_98 = arith.constant 0 : index
    %115 = vector.load %arg4[%c2_96, %c0_97, %c0_98] : memref<9x16x32xf32, #tpu.memory_space<vmem>>, vector<1x16x32xf32>
    %116 = vector.shape_cast %115 : vector<1x16x32xf32> to vector<16x32xf32>
    %cst_99 = arith.constant dense<0.000000e+00> : vector<24x32xf32>
    %117 = tpu.matmul %97, %116, %cst_99 {dimension_numbers = #tpu.dot_dimension_numbers<[1], [0], [0], [1], [0, 0, 1, 1], [], []>} : vector<24x16xf32>, vector<16x32xf32>, vector<24x32xf32> -> vector<24x32xf32>
    %c2_100 = arith.constant 2 : index
    %c0_101 = arith.constant 0 : index
    %c0_102 = arith.constant 0 : index
    %118 = vector.load %arg1[%c2_100, %c0_101, %c0_102] : memref<9x24x24xf32, #tpu.memory_space<vmem>>, vector<1x24x24xf32>
    %119 = vector.shape_cast %118 : vector<1x24x24xf32> to vector<24x24xf32>
    %cst_103 = arith.constant dense<0.000000e+00> : vector<24x32xf32>
    %120 = tpu.matmul %119, %117, %cst_103 {dimension_numbers = #tpu.dot_dimension_numbers<[1], [0], [0], [1], [0, 0, 1, 1], [], []>} : vector<24x24xf32>, vector<24x32xf32>, vector<24x32xf32> -> vector<24x32xf32>
    %121 = arith.addf %114, %120 : vector<24x32xf32>
    %c3_104 = arith.constant 3 : index
    %c0_105 = arith.constant 0 : index
    %c0_106 = arith.constant 0 : index
    %122 = vector.load %arg4[%c3_104, %c0_105, %c0_106] : memref<9x16x32xf32, #tpu.memory_space<vmem>>, vector<1x16x32xf32>
    %123 = vector.shape_cast %122 : vector<1x16x32xf32> to vector<16x32xf32>
    %cst_107 = arith.constant dense<0.000000e+00> : vector<24x32xf32>
    %124 = tpu.matmul %97, %123, %cst_107 {dimension_numbers = #tpu.dot_dimension_numbers<[1], [0], [0], [1], [0, 0, 1, 1], [], []>} : vector<24x16xf32>, vector<16x32xf32>, vector<24x32xf32> -> vector<24x32xf32>
    %c3_108 = arith.constant 3 : index
    %c0_109 = arith.constant 0 : index
    %c0_110 = arith.constant 0 : index
    %125 = vector.load %arg1[%c3_108, %c0_109, %c0_110] : memref<9x24x24xf32, #tpu.memory_space<vmem>>, vector<1x24x24xf32>
    %126 = vector.shape_cast %125 : vector<1x24x24xf32> to vector<24x24xf32>
    %cst_111 = arith.constant dense<0.000000e+00> : vector<24x32xf32>
    %127 = tpu.matmul %126, %124, %cst_111 {dimension_numbers = #tpu.dot_dimension_numbers<[1], [0], [0], [1], [0, 0, 1, 1], [], []>} : vector<24x24xf32>, vector<24x32xf32>, vector<24x32xf32> -> vector<24x32xf32>
    %128 = arith.addf %121, %127 : vector<24x32xf32>
    %c4_112 = arith.constant 4 : index
    %c0_113 = arith.constant 0 : index
    %c0_114 = arith.constant 0 : index
    %129 = vector.load %arg4[%c4_112, %c0_113, %c0_114] : memref<9x16x32xf32, #tpu.memory_space<vmem>>, vector<1x16x32xf32>
    %130 = vector.shape_cast %129 : vector<1x16x32xf32> to vector<16x32xf32>
    %cst_115 = arith.constant dense<0.000000e+00> : vector<24x32xf32>
    %131 = tpu.matmul %97, %130, %cst_115 {dimension_numbers = #tpu.dot_dimension_numbers<[1], [0], [0], [1], [0, 0, 1, 1], [], []>} : vector<24x16xf32>, vector<16x32xf32>, vector<24x32xf32> -> vector<24x32xf32>
    %c4_116 = arith.constant 4 : index
    %c0_117 = arith.constant 0 : index
    %c0_118 = arith.constant 0 : index
    %132 = vector.load %arg1[%c4_116, %c0_117, %c0_118] : memref<9x24x24xf32, #tpu.memory_space<vmem>>, vector<1x24x24xf32>
    %133 = vector.shape_cast %132 : vector<1x24x24xf32> to vector<24x24xf32>
    %cst_119 = arith.constant dense<0.000000e+00> : vector<24x32xf32>
    %134 = tpu.matmul %133, %131, %cst_119 {dimension_numbers = #tpu.dot_dimension_numbers<[1], [0], [0], [1], [0, 0, 1, 1], [], []>} : vector<24x24xf32>, vector<24x32xf32>, vector<24x32xf32> -> vector<24x32xf32>
    %135 = arith.addf %128, %134 : vector<24x32xf32>
    %c5_120 = arith.constant 5 : index
    %c0_121 = arith.constant 0 : index
    %c0_122 = arith.constant 0 : index
    %136 = vector.load %arg4[%c5_120, %c0_121, %c0_122] : memref<9x16x32xf32, #tpu.memory_space<vmem>>, vector<1x16x32xf32>
    %137 = vector.shape_cast %136 : vector<1x16x32xf32> to vector<16x32xf32>
    %cst_123 = arith.constant dense<0.000000e+00> : vector<24x32xf32>
    %138 = tpu.matmul %97, %137, %cst_123 {dimension_numbers = #tpu.dot_dimension_numbers<[1], [0], [0], [1], [0, 0, 1, 1], [], []>} : vector<24x16xf32>, vector<16x32xf32>, vector<24x32xf32> -> vector<24x32xf32>
    %c5_124 = arith.constant 5 : index
    %c0_125 = arith.constant 0 : index
    %c0_126 = arith.constant 0 : index
    %139 = vector.load %arg1[%c5_124, %c0_125, %c0_126] : memref<9x24x24xf32, #tpu.memory_space<vmem>>, vector<1x24x24xf32>
    %140 = vector.shape_cast %139 : vector<1x24x24xf32> to vector<24x24xf32>
    %cst_127 = arith.constant dense<0.000000e+00> : vector<24x32xf32>
    %141 = tpu.matmul %140, %138, %cst_127 {dimension_numbers = #tpu.dot_dimension_numbers<[1], [0], [0], [1], [0, 0, 1, 1], [], []>} : vector<24x24xf32>, vector<24x32xf32>, vector<24x32xf32> -> vector<24x32xf32>
    %142 = arith.addf %135, %141 : vector<24x32xf32>
    %c6_128 = arith.constant 6 : index
    %c0_129 = arith.constant 0 : index
    %c0_130 = arith.constant 0 : index
    %143 = vector.load %arg4[%c6_128, %c0_129, %c0_130] : memref<9x16x32xf32, #tpu.memory_space<vmem>>, vector<1x16x32xf32>
    %144 = vector.shape_cast %143 : vector<1x16x32xf32> to vector<16x32xf32>
    %cst_131 = arith.constant dense<0.000000e+00> : vector<24x32xf32>
    %145 = tpu.matmul %97, %144, %cst_131 {dimension_numbers = #tpu.dot_dimension_numbers<[1], [0], [0], [1], [0, 0, 1, 1], [], []>} : vector<24x16xf32>, vector<16x32xf32>, vector<24x32xf32> -> vector<24x32xf32>
    %c6_132 = arith.constant 6 : index
    %c0_133 = arith.constant 0 : index
    %c0_134 = arith.constant 0 : index
    %146 = vector.load %arg1[%c6_132, %c0_133, %c0_134] : memref<9x24x24xf32, #tpu.memory_space<vmem>>, vector<1x24x24xf32>
    %147 = vector.shape_cast %146 : vector<1x24x24xf32> to vector<24x24xf32>
    %cst_135 = arith.constant dense<0.000000e+00> : vector<24x32xf32>
    %148 = tpu.matmul %147, %145, %cst_135 {dimension_numbers = #tpu.dot_dimension_numbers<[1], [0], [0], [1], [0, 0, 1, 1], [], []>} : vector<24x24xf32>, vector<24x32xf32>, vector<24x32xf32> -> vector<24x32xf32>
    %149 = arith.addf %142, %148 : vector<24x32xf32>
    %c7_136 = arith.constant 7 : index
    %c0_137 = arith.constant 0 : index
    %c0_138 = arith.constant 0 : index
    %150 = vector.load %arg4[%c7_136, %c0_137, %c0_138] : memref<9x16x32xf32, #tpu.memory_space<vmem>>, vector<1x16x32xf32>
    %151 = vector.shape_cast %150 : vector<1x16x32xf32> to vector<16x32xf32>
    %cst_139 = arith.constant dense<0.000000e+00> : vector<24x32xf32>
    %152 = tpu.matmul %97, %151, %cst_139 {dimension_numbers = #tpu.dot_dimension_numbers<[1], [0], [0], [1], [0, 0, 1, 1], [], []>} : vector<24x16xf32>, vector<16x32xf32>, vector<24x32xf32> -> vector<24x32xf32>
    %c7_140 = arith.constant 7 : index
    %c0_141 = arith.constant 0 : index
    %c0_142 = arith.constant 0 : index
    %153 = vector.load %arg1[%c7_140, %c0_141, %c0_142] : memref<9x24x24xf32, #tpu.memory_space<vmem>>, vector<1x24x24xf32>
    %154 = vector.shape_cast %153 : vector<1x24x24xf32> to vector<24x24xf32>
    %cst_143 = arith.constant dense<0.000000e+00> : vector<24x32xf32>
    %155 = tpu.matmul %154, %152, %cst_143 {dimension_numbers = #tpu.dot_dimension_numbers<[1], [0], [0], [1], [0, 0, 1, 1], [], []>} : vector<24x24xf32>, vector<24x32xf32>, vector<24x32xf32> -> vector<24x32xf32>
    %156 = arith.addf %149, %155 : vector<24x32xf32>
    %c8_144 = arith.constant 8 : index
    %c0_145 = arith.constant 0 : index
    %c0_146 = arith.constant 0 : index
    %157 = vector.load %arg4[%c8_144, %c0_145, %c0_146] : memref<9x16x32xf32, #tpu.memory_space<vmem>>, vector<1x16x32xf32>
    %158 = vector.shape_cast %157 : vector<1x16x32xf32> to vector<16x32xf32>
    %cst_147 = arith.constant dense<0.000000e+00> : vector<24x32xf32>
    %159 = tpu.matmul %97, %158, %cst_147 {dimension_numbers = #tpu.dot_dimension_numbers<[1], [0], [0], [1], [0, 0, 1, 1], [], []>} : vector<24x16xf32>, vector<16x32xf32>, vector<24x32xf32> -> vector<24x32xf32>
    %c8_148 = arith.constant 8 : index
    %c0_149 = arith.constant 0 : index
    %c0_150 = arith.constant 0 : index
    %160 = vector.load %arg1[%c8_148, %c0_149, %c0_150] : memref<9x24x24xf32, #tpu.memory_space<vmem>>, vector<1x24x24xf32>
    %161 = vector.shape_cast %160 : vector<1x24x24xf32> to vector<24x24xf32>
    %cst_151 = arith.constant dense<0.000000e+00> : vector<24x32xf32>
    %162 = tpu.matmul %161, %159, %cst_151 {dimension_numbers = #tpu.dot_dimension_numbers<[1], [0], [0], [1], [0, 0, 1, 1], [], []>} : vector<24x24xf32>, vector<24x32xf32>, vector<24x32xf32> -> vector<24x32xf32>
    %163 = arith.addf %156, %162 : vector<24x32xf32>
    %cst_152 = arith.constant dense<0.000000e+00> : vector<32xf32>
    %164 = vector.multi_reduction <add>, %163, %cst_152 [0] : vector<24x32xf32> to vector<32xf32>
    %165 = vector.shape_cast %164 : vector<32xf32> to vector<1x32xf32>
    %cst_153 = arith.constant 0.055555556 : f32
    %166 = vector.broadcast %cst_153 : f32 to vector<1x32xf32>
    %167 = arith.mulf %165, %166 : vector<1x32xf32>
    %168 = vector.broadcast %167 : vector<1x32xf32> to vector<24x32xf32>
    %169 = arith.subf %163, %168 : vector<24x32xf32>
    %170 = vector.broadcast %4 : vector<24x1xf32> to vector<24x32xf32>
    %171 = arith.mulf %169, %170 : vector<24x32xf32>
    %172 = arith.mulf %171, %171 : vector<24x32xf32>
    %cst_154 = arith.constant dense<0.000000e+00> : vector<32xf32>
    %173 = vector.multi_reduction <add>, %172, %cst_154 [0] : vector<24x32xf32> to vector<32xf32>
    %174 = vector.shape_cast %173 : vector<32xf32> to vector<1x32xf32>
    %cst_155 = arith.constant 0.055555556 : f32
    %175 = vector.broadcast %cst_155 : f32 to vector<1x32xf32>
    %176 = arith.mulf %174, %175 : vector<1x32xf32>
    %cst_156 = arith.constant 9.99999974E-6 : f32
    %177 = vector.broadcast %cst_156 : f32 to vector<1x32xf32>
    %178 = arith.addf %176, %177 : vector<1x32xf32>
    %179 = math.rsqrt %178 : vector<1x32xf32>
    %180 = vector.broadcast %179 : vector<1x32xf32> to vector<24x32xf32>
    %181 = arith.mulf %171, %180 : vector<24x32xf32>
    %182 = vector.broadcast %98 : vector<1x32xf32> to vector<24x32xf32>
    %183 = arith.mulf %182, %181 : vector<24x32xf32>
    %184 = vector.broadcast %99 : vector<1x32xf32> to vector<24x32xf32>
    %185 = arith.addf %183, %184 : vector<24x32xf32>
    %cst_157 = arith.constant 0.000000e+00 : f32
    %186 = vector.broadcast %cst_157 : f32 to vector<24x32xf32>
    %187 = arith.maximumf %185, %186 : vector<24x32xf32>
    %188 = vector.broadcast %4 : vector<24x1xf32> to vector<24x32xf32>
    %189 = arith.mulf %187, %188 : vector<24x32xf32>
    %cst_158 = arith.constant 0.000000e+00 : f32
    %190 = vector.broadcast %cst_158 : f32 to vector<2x64xf32>
    %c0_159 = arith.constant 0 : index
    %c0_160 = arith.constant 0 : index
    %c0_161 = arith.constant 0 : index
    %191 = vector.load %arg2[%c0_159, %c0_160, %c0_161] : memref<9x2x24xf32, #tpu.memory_space<vmem>>, vector<1x2x24xf32>
    %192 = vector.shape_cast %191 : vector<1x2x24xf32> to vector<2x24xf32>
    %cst_162 = arith.constant dense<0.000000e+00> : vector<2x32xf32>
    %193 = tpu.matmul %192, %189, %cst_162 {dimension_numbers = #tpu.dot_dimension_numbers<[1], [0], [0], [1], [0, 0, 1, 1], [], []>} : vector<2x24xf32>, vector<24x32xf32>, vector<2x32xf32> -> vector<2x32xf32>
    %c0_163 = arith.constant 0 : index
    %c0_164 = arith.constant 0 : index
    %c0_165 = arith.constant 0 : index
    %194 = vector.load %arg5[%c0_163, %c0_164, %c0_165] : memref<9x32x64xf32, #tpu.memory_space<vmem>>, vector<1x32x64xf32>
    %195 = vector.shape_cast %194 : vector<1x32x64xf32> to vector<32x64xf32>
    %cst_166 = arith.constant dense<0.000000e+00> : vector<2x64xf32>
    %196 = tpu.matmul %193, %195, %cst_166 {dimension_numbers = #tpu.dot_dimension_numbers<[1], [0], [0], [1], [0, 0, 1, 1], [], []>} : vector<2x32xf32>, vector<32x64xf32>, vector<2x64xf32> -> vector<2x64xf32>
    %197 = arith.addf %190, %196 : vector<2x64xf32>
    %c1_167 = arith.constant 1 : index
    %c0_168 = arith.constant 0 : index
    %c0_169 = arith.constant 0 : index
    %198 = vector.load %arg2[%c1_167, %c0_168, %c0_169] : memref<9x2x24xf32, #tpu.memory_space<vmem>>, vector<1x2x24xf32>
    %199 = vector.shape_cast %198 : vector<1x2x24xf32> to vector<2x24xf32>
    %cst_170 = arith.constant dense<0.000000e+00> : vector<2x32xf32>
    %200 = tpu.matmul %199, %189, %cst_170 {dimension_numbers = #tpu.dot_dimension_numbers<[1], [0], [0], [1], [0, 0, 1, 1], [], []>} : vector<2x24xf32>, vector<24x32xf32>, vector<2x32xf32> -> vector<2x32xf32>
    %c1_171 = arith.constant 1 : index
    %c0_172 = arith.constant 0 : index
    %c0_173 = arith.constant 0 : index
    %201 = vector.load %arg5[%c1_171, %c0_172, %c0_173] : memref<9x32x64xf32, #tpu.memory_space<vmem>>, vector<1x32x64xf32>
    %202 = vector.shape_cast %201 : vector<1x32x64xf32> to vector<32x64xf32>
    %cst_174 = arith.constant dense<0.000000e+00> : vector<2x64xf32>
    %203 = tpu.matmul %200, %202, %cst_174 {dimension_numbers = #tpu.dot_dimension_numbers<[1], [0], [0], [1], [0, 0, 1, 1], [], []>} : vector<2x32xf32>, vector<32x64xf32>, vector<2x64xf32> -> vector<2x64xf32>
    %204 = arith.addf %197, %203 : vector<2x64xf32>
    %c2_175 = arith.constant 2 : index
    %c0_176 = arith.constant 0 : index
    %c0_177 = arith.constant 0 : index
    %205 = vector.load %arg2[%c2_175, %c0_176, %c0_177] : memref<9x2x24xf32, #tpu.memory_space<vmem>>, vector<1x2x24xf32>
    %206 = vector.shape_cast %205 : vector<1x2x24xf32> to vector<2x24xf32>
    %cst_178 = arith.constant dense<0.000000e+00> : vector<2x32xf32>
    %207 = tpu.matmul %206, %189, %cst_178 {dimension_numbers = #tpu.dot_dimension_numbers<[1], [0], [0], [1], [0, 0, 1, 1], [], []>} : vector<2x24xf32>, vector<24x32xf32>, vector<2x32xf32> -> vector<2x32xf32>
    %c2_179 = arith.constant 2 : index
    %c0_180 = arith.constant 0 : index
    %c0_181 = arith.constant 0 : index
    %208 = vector.load %arg5[%c2_179, %c0_180, %c0_181] : memref<9x32x64xf32, #tpu.memory_space<vmem>>, vector<1x32x64xf32>
    %209 = vector.shape_cast %208 : vector<1x32x64xf32> to vector<32x64xf32>
    %cst_182 = arith.constant dense<0.000000e+00> : vector<2x64xf32>
    %210 = tpu.matmul %207, %209, %cst_182 {dimension_numbers = #tpu.dot_dimension_numbers<[1], [0], [0], [1], [0, 0, 1, 1], [], []>} : vector<2x32xf32>, vector<32x64xf32>, vector<2x64xf32> -> vector<2x64xf32>
    %211 = arith.addf %204, %210 : vector<2x64xf32>
    %c3_183 = arith.constant 3 : index
    %c0_184 = arith.constant 0 : index
    %c0_185 = arith.constant 0 : index
    %212 = vector.load %arg2[%c3_183, %c0_184, %c0_185] : memref<9x2x24xf32, #tpu.memory_space<vmem>>, vector<1x2x24xf32>
    %213 = vector.shape_cast %212 : vector<1x2x24xf32> to vector<2x24xf32>
    %cst_186 = arith.constant dense<0.000000e+00> : vector<2x32xf32>
    %214 = tpu.matmul %213, %189, %cst_186 {dimension_numbers = #tpu.dot_dimension_numbers<[1], [0], [0], [1], [0, 0, 1, 1], [], []>} : vector<2x24xf32>, vector<24x32xf32>, vector<2x32xf32> -> vector<2x32xf32>
    %c3_187 = arith.constant 3 : index
    %c0_188 = arith.constant 0 : index
    %c0_189 = arith.constant 0 : index
    %215 = vector.load %arg5[%c3_187, %c0_188, %c0_189] : memref<9x32x64xf32, #tpu.memory_space<vmem>>, vector<1x32x64xf32>
    %216 = vector.shape_cast %215 : vector<1x32x64xf32> to vector<32x64xf32>
    %cst_190 = arith.constant dense<0.000000e+00> : vector<2x64xf32>
    %217 = tpu.matmul %214, %216, %cst_190 {dimension_numbers = #tpu.dot_dimension_numbers<[1], [0], [0], [1], [0, 0, 1, 1], [], []>} : vector<2x32xf32>, vector<32x64xf32>, vector<2x64xf32> -> vector<2x64xf32>
    %218 = arith.addf %211, %217 : vector<2x64xf32>
    %c4_191 = arith.constant 4 : index
    %c0_192 = arith.constant 0 : index
    %c0_193 = arith.constant 0 : index
    %219 = vector.load %arg2[%c4_191, %c0_192, %c0_193] : memref<9x2x24xf32, #tpu.memory_space<vmem>>, vector<1x2x24xf32>
    %220 = vector.shape_cast %219 : vector<1x2x24xf32> to vector<2x24xf32>
    %cst_194 = arith.constant dense<0.000000e+00> : vector<2x32xf32>
    %221 = tpu.matmul %220, %189, %cst_194 {dimension_numbers = #tpu.dot_dimension_numbers<[1], [0], [0], [1], [0, 0, 1, 1], [], []>} : vector<2x24xf32>, vector<24x32xf32>, vector<2x32xf32> -> vector<2x32xf32>
    %c4_195 = arith.constant 4 : index
    %c0_196 = arith.constant 0 : index
    %c0_197 = arith.constant 0 : index
    %222 = vector.load %arg5[%c4_195, %c0_196, %c0_197] : memref<9x32x64xf32, #tpu.memory_space<vmem>>, vector<1x32x64xf32>
    %223 = vector.shape_cast %222 : vector<1x32x64xf32> to vector<32x64xf32>
    %cst_198 = arith.constant dense<0.000000e+00> : vector<2x64xf32>
    %224 = tpu.matmul %221, %223, %cst_198 {dimension_numbers = #tpu.dot_dimension_numbers<[1], [0], [0], [1], [0, 0, 1, 1], [], []>} : vector<2x32xf32>, vector<32x64xf32>, vector<2x64xf32> -> vector<2x64xf32>
    %225 = arith.addf %218, %224 : vector<2x64xf32>
    %c5_199 = arith.constant 5 : index
    %c0_200 = arith.constant 0 : index
    %c0_201 = arith.constant 0 : index
    %226 = vector.load %arg2[%c5_199, %c0_200, %c0_201] : memref<9x2x24xf32, #tpu.memory_space<vmem>>, vector<1x2x24xf32>
    %227 = vector.shape_cast %226 : vector<1x2x24xf32> to vector<2x24xf32>
    %cst_202 = arith.constant dense<0.000000e+00> : vector<2x32xf32>
    %228 = tpu.matmul %227, %189, %cst_202 {dimension_numbers = #tpu.dot_dimension_numbers<[1], [0], [0], [1], [0, 0, 1, 1], [], []>} : vector<2x24xf32>, vector<24x32xf32>, vector<2x32xf32> -> vector<2x32xf32>
    %c5_203 = arith.constant 5 : index
    %c0_204 = arith.constant 0 : index
    %c0_205 = arith.constant 0 : index
    %229 = vector.load %arg5[%c5_203, %c0_204, %c0_205] : memref<9x32x64xf32, #tpu.memory_space<vmem>>, vector<1x32x64xf32>
    %230 = vector.shape_cast %229 : vector<1x32x64xf32> to vector<32x64xf32>
    %cst_206 = arith.constant dense<0.000000e+00> : vector<2x64xf32>
    %231 = tpu.matmul %228, %230, %cst_206 {dimension_numbers = #tpu.dot_dimension_numbers<[1], [0], [0], [1], [0, 0, 1, 1], [], []>} : vector<2x32xf32>, vector<32x64xf32>, vector<2x64xf32> -> vector<2x64xf32>
    %232 = arith.addf %225, %231 : vector<2x64xf32>
    %c6_207 = arith.constant 6 : index
    %c0_208 = arith.constant 0 : index
    %c0_209 = arith.constant 0 : index
    %233 = vector.load %arg2[%c6_207, %c0_208, %c0_209] : memref<9x2x24xf32, #tpu.memory_space<vmem>>, vector<1x2x24xf32>
    %234 = vector.shape_cast %233 : vector<1x2x24xf32> to vector<2x24xf32>
    %cst_210 = arith.constant dense<0.000000e+00> : vector<2x32xf32>
    %235 = tpu.matmul %234, %189, %cst_210 {dimension_numbers = #tpu.dot_dimension_numbers<[1], [0], [0], [1], [0, 0, 1, 1], [], []>} : vector<2x24xf32>, vector<24x32xf32>, vector<2x32xf32> -> vector<2x32xf32>
    %c6_211 = arith.constant 6 : index
    %c0_212 = arith.constant 0 : index
    %c0_213 = arith.constant 0 : index
    %236 = vector.load %arg5[%c6_211, %c0_212, %c0_213] : memref<9x32x64xf32, #tpu.memory_space<vmem>>, vector<1x32x64xf32>
    %237 = vector.shape_cast %236 : vector<1x32x64xf32> to vector<32x64xf32>
    %cst_214 = arith.constant dense<0.000000e+00> : vector<2x64xf32>
    %238 = tpu.matmul %235, %237, %cst_214 {dimension_numbers = #tpu.dot_dimension_numbers<[1], [0], [0], [1], [0, 0, 1, 1], [], []>} : vector<2x32xf32>, vector<32x64xf32>, vector<2x64xf32> -> vector<2x64xf32>
    %239 = arith.addf %232, %238 : vector<2x64xf32>
    %c7_215 = arith.constant 7 : index
    %c0_216 = arith.constant 0 : index
    %c0_217 = arith.constant 0 : index
    %240 = vector.load %arg2[%c7_215, %c0_216, %c0_217] : memref<9x2x24xf32, #tpu.memory_space<vmem>>, vector<1x2x24xf32>
    %241 = vector.shape_cast %240 : vector<1x2x24xf32> to vector<2x24xf32>
    %cst_218 = arith.constant dense<0.000000e+00> : vector<2x32xf32>
    %242 = tpu.matmul %241, %189, %cst_218 {dimension_numbers = #tpu.dot_dimension_numbers<[1], [0], [0], [1], [0, 0, 1, 1], [], []>} : vector<2x24xf32>, vector<24x32xf32>, vector<2x32xf32> -> vector<2x32xf32>
    %c7_219 = arith.constant 7 : index
    %c0_220 = arith.constant 0 : index
    %c0_221 = arith.constant 0 : index
    %243 = vector.load %arg5[%c7_219, %c0_220, %c0_221] : memref<9x32x64xf32, #tpu.memory_space<vmem>>, vector<1x32x64xf32>
    %244 = vector.shape_cast %243 : vector<1x32x64xf32> to vector<32x64xf32>
    %cst_222 = arith.constant dense<0.000000e+00> : vector<2x64xf32>
    %245 = tpu.matmul %242, %244, %cst_222 {dimension_numbers = #tpu.dot_dimension_numbers<[1], [0], [0], [1], [0, 0, 1, 1], [], []>} : vector<2x32xf32>, vector<32x64xf32>, vector<2x64xf32> -> vector<2x64xf32>
    %246 = arith.addf %239, %245 : vector<2x64xf32>
    %c8_223 = arith.constant 8 : index
    %c0_224 = arith.constant 0 : index
    %c0_225 = arith.constant 0 : index
    %247 = vector.load %arg2[%c8_223, %c0_224, %c0_225] : memref<9x2x24xf32, #tpu.memory_space<vmem>>, vector<1x2x24xf32>
    %248 = vector.shape_cast %247 : vector<1x2x24xf32> to vector<2x24xf32>
    %cst_226 = arith.constant dense<0.000000e+00> : vector<2x32xf32>
    %249 = tpu.matmul %248, %189, %cst_226 {dimension_numbers = #tpu.dot_dimension_numbers<[1], [0], [0], [1], [0, 0, 1, 1], [], []>} : vector<2x24xf32>, vector<24x32xf32>, vector<2x32xf32> -> vector<2x32xf32>
    %c8_227 = arith.constant 8 : index
    %c0_228 = arith.constant 0 : index
    %c0_229 = arith.constant 0 : index
    %250 = vector.load %arg5[%c8_227, %c0_228, %c0_229] : memref<9x32x64xf32, #tpu.memory_space<vmem>>, vector<1x32x64xf32>
    %251 = vector.shape_cast %250 : vector<1x32x64xf32> to vector<32x64xf32>
    %cst_230 = arith.constant dense<0.000000e+00> : vector<2x64xf32>
    %252 = tpu.matmul %249, %251, %cst_230 {dimension_numbers = #tpu.dot_dimension_numbers<[1], [0], [0], [1], [0, 0, 1, 1], [], []>} : vector<2x32xf32>, vector<32x64xf32>, vector<2x64xf32> -> vector<2x64xf32>
    %253 = arith.addf %246, %252 : vector<2x64xf32>
    %c0_231 = arith.constant 0 : index
    %c0_232 = arith.constant 0 : index
    %254 = vector.load %arg8[%c0_231, %c0_232] : memref<2x128xf32, #tpu.memory_space<vmem>>, vector<1x64xf32>
    %255 = vector.broadcast %254 : vector<1x64xf32> to vector<2x64xf32>
    %256 = arith.addf %253, %255 : vector<2x64xf32>
    %cst_233 = arith.constant 0.000000e+00 : f32
    %257 = vector.broadcast %cst_233 : f32 to vector<2x64xf32>
    %258 = arith.maximumf %256, %257 : vector<2x64xf32>
    %c0_234 = arith.constant 0 : index
    %c0_235 = arith.constant 0 : index
    %259 = vector.load %arg6[%c0_234, %c0_235] : memref<64x128xf32, #tpu.memory_space<vmem>>, vector<64x128xf32>
    %cst_236 = arith.constant dense<0.000000e+00> : vector<2x128xf32>
    %260 = tpu.matmul %258, %259, %cst_236 {dimension_numbers = #tpu.dot_dimension_numbers<[1], [0], [0], [1], [0, 0, 1, 1], [], []>} : vector<2x64xf32>, vector<64x128xf32>, vector<2x128xf32> -> vector<2x128xf32>
    %c1_237 = arith.constant 1 : index
    %c0_238 = arith.constant 0 : index
    %261 = vector.load %arg8[%c1_237, %c0_238] : memref<2x128xf32, #tpu.memory_space<vmem>>, vector<1x128xf32>
    %262 = vector.broadcast %261 : vector<1x128xf32> to vector<2x128xf32>
    %263 = arith.addf %260, %262 : vector<2x128xf32>
    %c0_239 = arith.constant 0 : index
    %c0_240 = arith.constant 0 : index
    %264 = vector.load %arg9[%c0_239, %c0_240] : memref<2x128xf32, #tpu.memory_space<vmem>>, vector<2x128xf32>
    tpu.vector_store %arg9[%c0_239, %c0_240], %263 {strides = array<i32>} : memref<2x128xf32, #tpu.memory_space<vmem>>, vector<2x128xf32>,
    return
  }
}

</mosaic_0001>

<llo_original>
// kernel: cnn_forward.1
$region0: #{cnn_forward.1}
  #allocation0 [shape = 'u32[]', space=smem, size = 0x4, offset = 0x4, fixed_abs, tag = 'smem constant byte address 0x4 - core index']
  #allocation1 [shape = 'u32[72,128]{1,0:T(1,128)}', space=vmem, size = 0x9000, scoped, tag = 'internal scratch']
  %s0 = inlined_call_operand.vmem [shape: f32[24,3], index: 0, kind: input, shape index: {}]
  %s1 = inlined_call_operand.vmem [shape: f32[9,24,24], index: 1, kind: input, shape index: {}]
  %s2 = inlined_call_operand.vmem [shape: f32[9,2,24], index: 2, kind: input, shape index: {}]
  %s3 = inlined_call_operand.vmem [shape: f32[9,3,16], index: 3, kind: input, shape index: {}]
  %s4 = inlined_call_operand.vmem [shape: f32[9,16,32], index: 4, kind: input, shape index: {}]
  %s5 = inlined_call_operand.vmem [shape: f32[9,32,64], index: 5, kind: input, shape index: {}]
  %s6 = inlined_call_operand.vmem [shape: f32[64,128], index: 6, kind: input, shape index: {}]
  %s7 = inlined_call_operand.vmem [shape: f32[4,32], index: 7, kind: input, shape index: {}]
  %s8 = inlined_call_operand.vmem [shape: f32[2,128], index: 8, kind: input, shape index: {}]
  %s9 = inlined_call_operand.hbm [shape: f32[2,128], index: 9, kind: output, shape index: {}]
  %s10 = sld [smem:[#allocation0]]
  $region46: #{cnn_forward.1} parent=0
    _
  %s12 = ssub.s32 1, %s10
  %s13 = scalar_select 0, %s12, %s10
  $region1: #{cnn_forward.1} parent=0
    #allocation2 [shape = 'u8[1024]{0}', space=vmem, size = 0x400, scoped, tag = 'output window, operand 0, single buffered']
    #allocation3 [shape = 's32[1]{0}', space=sflag, size = 0x4, scoped, tag = 'scoped memory for cnn_forward.1']
    %14 = vsyncpa [#allocation3], 0
    // Predicated region
    $region2: #{cnn_forward.1} parent=1 // pred_check
      _
    $region3: #{cnn_forward.1} parent=1 // pred_check_branch
      %16 = sbr.rel (0) target = $region5
    $region4: #{cnn_forward.1} parent=1 // pred_region
      _
    $region5: #{cnn_forward.1} parent=1 // pred_fallthru
      _
    // Predicated region
    $region6: #{cnn_forward.1} parent=1 // pred_check
      _
    $region7: #{cnn_forward.1} parent=1 // pred_check_branch
      %18 = sbr.rel (0) target = $region9
    $region8: #{cnn_forward.1} parent=1 // pred_region
      _
    $region9: #{cnn_forward.1} parent=1 // pred_fallthru
      _
    // Predicated region
    $region10: #{cnn_forward.1} parent=1 // pred_check
      _
    $region11: #{cnn_forward.1} parent=1 // pred_check_branch
      %20 = sbr.rel (0) target = $region13
    $region12: #{cnn_forward.1} parent=1 // pred_region
      _
    $region13: #{cnn_forward.1} parent=1 // pred_fallthru
      _
    // Predicated region
    $region14: #{cnn_forward.1} parent=1 // pred_check
      _
    $region15: #{cnn_forward.1} parent=1 // pred_check_branch
      %22 = sbr.rel (0) target = $region17
    $region16: #{cnn_forward.1} parent=1 // pred_region
      _
    $region17: #{cnn_forward.1} parent=1 // pred_fallthru
      _
    // Predicated region
    $region18: #{cnn_forward.1} parent=1 // pred_check
      _
    $region19: #{cnn_forward.1} parent=1 // pred_check_branch
      %24 = sbr.rel (0) target = $region21
    $region20: #{cnn_forward.1} parent=1 // pred_region
      _
    $region21: #{cnn_forward.1} parent=1 // pred_fallthru
      _
    // Predicated region
    $region22: #{cnn_forward.1} parent=1 // pred_check
      _
    $region23: #{cnn_forward.1} parent=1 // pred_check_branch
      %26 = sbr.rel (0) target = $region25
    $region24: #{cnn_forward.1} parent=1 // pred_region
      _
    $region25: #{cnn_forward.1} parent=1 // pred_fallthru
      _
    // Predicated region
    $region26: #{cnn_forward.1} parent=1 // pred_check
      _
    $region27: #{cnn_forward.1} parent=1 // pred_check_branch
      %28 = sbr.rel (0) target = $region29
    $region28: #{cnn_forward.1} parent=1 // pred_region
      _
    $region29: #{cnn_forward.1} parent=1 // pred_fallthru
      _
    // Predicated region
    $region30: #{cnn_forward.1} parent=1 // pred_check
      _
    $region31: #{cnn_forward.1} parent=1 // pred_check_branch
      %30 = sbr.rel (0) target = $region33
    $region32: #{cnn_forward.1} parent=1 // pred_region
      _
    $region33: #{cnn_forward.1} parent=1 // pred_fallthru
      _
    // Predicated region
    $region34: #{cnn_forward.1} parent=1 // pred_check
      _
    $region35: #{cnn_forward.1} parent=1 // pred_check_branch
      %32 = sbr.rel (0) target = $region37
    $region36: #{cnn_forward.1} parent=1 // pred_region
      _
    $region37: #{cnn_forward.1} parent=1 // pred_fallthru
      _
    %v33 = vlaneseq
    %v34 = vshrl.u32 %v33, 7
    %v35 = vadd.s32 %v34, 8
    %v36 = vadd.s32 %v34, 16
    %vm37 = vcmp.lt.s32.totalorder %v34, 18
    %vm38 = vcmp.lt.s32.totalorder %v35, 18
    %vm39 = vcmp.lt.s32.totalorder %v36, 18
    %v40 = vsel %vm37, 1, 0
    %v41 = vsel %vm38, 1, 0
    %v42 = vsel %vm39, 1, 0
    %v43 = vcvt.s32.f32 %v40
    %v44 = vcvt.s32.f32 %v41
    %v45 = vcvt.s32.f32 %v42
    %v46 = vld [vmem:[%s0] sm:$0xff]
    %v47 = vld [vmem:[%s0 + $0x8] sm:$0xff]
    %v48 = vld [vmem:[%s0 + $0x10] sm:$0xff]
    %v49 = vld [vmem:[%s7] sm:$0x1]
    %v50 = vld [vmem:[%s7 + $0x1] sm:$0x1]
    %v51 = vld [vmem:[%s3] sm:$0x7]
    %vm52 = vcmask 23552
    %v54 = vsel %vm52, %v46, 0
    %v57 = vsel %vm52, %v47, 0
    %v60 = vsel %vm52, %v48, 0
    %vm62 = vcmask 1042432
    %v64 = vsel %vm62, %v51, 0
    %66 = vmatpush.msra.mxu0 0.0
    %67 = vmatpush.msra.mxu0 0.0
    %68 = vmatpush.msra.mxu0 0.0
    %69 = vmatpush.msra.mxu0 0.0
    %70 = vmatpush.msra.mxu0 0.0
    %71 = vmatpush.msra.mxu0 0.0
    %72 = vmatpush.msra.mxu0 0.0
    %73 = vmatpush.msra.mxu0 0.0
    %74 = vmatpush.msra.mxu0 0.0
    %75 = vmatpush.msra.mxu0 0.0
    %76 = vmatpush.msra.mxu0 0.0
    %77 = vmatpush.msra.mxu0 0.0
    %78 = vmatpush.msra.mxu0 0.0
    %79 = vmatpush.msra.mxu0 0.0
    %80 = vmatpush.msra.mxu0 0.0
    %81 = vmatpush.msra.mxu0 %v64
    %82 = vmatmul.f32.gmra.mxu0 %v54
    %v83 = vpop.f32.mrf.mxu0
    %v84 = vadd.f32 0.0, %v83
    %85 = vmatmul.f32.gmra.mxu0 %v57
    %v86 = vpop.f32.mrf.mxu0
    %v87 = vadd.f32 0.0, %v86
    %88 = vmatmul.f32.gmra.mxu0 %v60
    %v89 = vpop.f32.mrf.mxu0
    %v90 = vadd.f32 0.0, %v89
    %91 = vdwg.mxu0
    %v92 = vld [vmem:[%s1] sm:$0xff]
    %v93 = vld [vmem:[%s1 + $0x8] sm:$0xff]
    %v94 = vld [vmem:[%s1 + $0x10] sm:$0xff]
    %s95 = scalar_lea.vmem %s3, 4
    %v96 = vld [vmem:[%s95] sm:$0x7]
    %v98 = vsel %vm62, %v96, 0
    %100 = vmatpush.msra.mxu0 0.0
    %101 = vmatpush.msra.mxu0 0.0
    %102 = vmatpush.msra.mxu0 0.0
    %103 = vmatpush.msra.mxu0 0.0
    %104 = vmatpush.msra.mxu0 0.0
    %105 = vmatpush.msra.mxu0 0.0
    %106 = vmatpush.msra.mxu0 0.0
    %107 = vmatpush.msra.mxu0 0.0
    %108 = vmatpush.msra.mxu0 0.0
    %109 = vmatpush.msra.mxu0 0.0
    %110 = vmatpush.msra.mxu0 0.0
    %111 = vmatpush.msra.mxu0 0.0
    %112 = vmatpush.msra.mxu0 0.0
    %113 = vmatpush.msra.mxu0 0.0
    %114 = vmatpush.msra.mxu0 0.0
    %115 = vmatpush.msra.mxu0 %v98
    %116 = vmatmul.f32.gmra.mxu0 %v54
    %v117 = vpop.f32.mrf.mxu0
    %v118 = vadd.f32 0.0, %v117
    %119 = vmatmul.f32.gmra.mxu0 %v57
    %v120 = vpop.f32.mrf.mxu0
    %v121 = vadd.f32 0.0, %v120
    %122 = vmatmul.f32.gmra.mxu0 %v60
    %v123 = vpop.f32.mrf.mxu0
    %v124 = vadd.f32 0.0, %v123
    %125 = vdwg.mxu0
    %s126 = scalar_lea.vmem %s1, 24
    %v127 = vld [vmem:[%s126] sm:$0xff]
    %v128 = vld [vmem:[%s126 + $0x8] sm:$0xff]
    %v129 = vld [vmem:[%s126 + $0x10] sm:$0xff]
    %vm130 = vcmask 195584
    %v132 = vsel %vm130, %v127, 0
    %v135 = vsel %vm130, %v128, 0
    %v138 = vsel %vm130, %v129, 0
    %140 = vmatpush.msra.mxu0 0.0
    %141 = vmatpush.msra.mxu0 0.0
    %142 = vmatpush.msra.mxu0 0.0
    %143 = vmatpush.msra.mxu0 0.0
    %144 = vmatpush.msra.mxu0 0.0
    %145 = vmatpush.msra.mxu0 0.0
    %146 = vmatpush.msra.mxu0 0.0
    %147 = vmatpush.msra.mxu0 0.0
    %148 = vmatpush.msra.mxu0 0.0
    %149 = vmatpush.msra.mxu0 0.0
    %150 = vmatpush.msra.mxu0 0.0
    %151 = vmatpush.msra.mxu0 0.0
    %152 = vmatpush.msra.mxu0 0.0
    %153 = vmatpush.msra.mxu0 %v124
    %154 = vmatpush.msra.mxu0 %v121
    %155 = vmatpush.msra.mxu0 %v118
    %156 = vmatmul.f32.gmra.mxu0 %v132
    %v157 = vpop.f32.mrf.mxu0
    %v158 = vadd.f32 0.0, %v157
    %159 = vmatmul.f32.gmra.mxu0 %v135
    %v160 = vpop.f32.mrf.mxu0
    %v161 = vadd.f32 0.0, %v160
    %162 = vmatmul.f32.gmra.mxu0 %v138
    %v163 = vpop.f32.mrf.mxu0
    %v164 = vadd.f32 0.0, %v163
    %165 = vdwg.mxu0
    %v167 = vsel %vm130, %v92, 0
    %v170 = vsel %vm130, %v93, 0
    %v173 = vsel %vm130, %v94, 0
    %175 = vmatpush.msra.mxu0 0.0
    %176 = vmatpush.msra.mxu0 0.0
    %177 = vmatpush.msra.mxu0 0.0
    %178 = vmatpush.msra.mxu0 0.0
    %179 = vmatpush.msra.mxu0 0.0
    %180 = vmatpush.msra.mxu0 0.0
    %181 = vmatpush.msra.mxu0 0.0
    %182 = vmatpush.msra.mxu0 0.0
    %183 = vmatpush.msra.mxu0 0.0
    %184 = vmatpush.msra.mxu0 0.0
    %185 = vmatpush.msra.mxu0 0.0
    %186 = vmatpush.msra.mxu0 0.0
    %187 = vmatpush.msra.mxu0 0.0
    %188 = vmatpush.msra.mxu0 %v90
    %189 = vmatpush.msra.mxu0 %v87
    %190 = vmatpush.msra.mxu0 %v84
    %191 = vmatmul.f32.gmra.mxu0 %v167
    %v192 = vpop.f32.mrf.mxu0
    %v193 = vadd.f32 %v158, %v192
    %194 = vmatmul.f32.gmra.mxu0 %v170
    %v195 = vpop.f32.mrf.mxu0
    %v196 = vadd.f32 %v161, %v195
    %197 = vmatmul.f32.gmra.mxu0 %v173
    %v198 = vpop.f32.mrf.mxu0
    %v199 = vadd.f32 %v164, %v198
    %200 = vdwg.mxu0
    %s201 = scalar_lea.vmem %s3, 8
    %v202 = vld [vmem:[%s201] sm:$0x7]
    %v204 = vsel %vm62, %v202, 0
    %206 = vmatpush.msra.mxu0 0.0
    %207 = vmatpush.msra.mxu0 0.0
    %208 = vmatpush.msra.mxu0 0.0
    %209 = vmatpush.msra.mxu0 0.0
    %210 = vmatpush.msra.mxu0 0.0
    %211 = vmatpush.msra.mxu0 0.0
    %212 = vmatpush.msra.mxu0 0.0
    %213 = vmatpush.msra.mxu0 0.0
    %214 = vmatpush.msra.mxu0 0.0
    %215 = vmatpush.msra.mxu0 0.0
    %216 = vmatpush.msra.mxu0 0.0
    %217 = vmatpush.msra.mxu0 0.0
    %218 = vmatpush.msra.mxu0 0.0
    %219 = vmatpush.msra.mxu0 0.0
    %220 = vmatpush.msra.mxu0 0.0
    %221 = vmatpush.msra.mxu0 %v204
    %222 = vmatmul.f32.gmra.mxu0 %v54
    %v223 = vpop.f32.mrf.mxu0
    %v224 = vadd.f32 0.0, %v223
    %225 = vmatmul.f32.gmra.mxu0 %v57
    %v226 = vpop.f32.mrf.mxu0
    %v227 = vadd.f32 0.0, %v226
    %228 = vmatmul.f32.gmra.mxu0 %v60
    %v229 = vpop.f32.mrf.mxu0
    %v230 = vadd.f32 0.0, %v229
    %231 = vdwg.mxu0
    %s232 = scalar_lea.vmem %s1, 48
    %v233 = vld [vmem:[%s232] sm:$0xff]
    %v234 = vld [vmem:[%s232 + $0x8] sm:$0xff]
    %v235 = vld [vmem:[%s232 + $0x10] sm:$0xff]
    %v237 = vsel %vm130, %v233, 0
    %v240 = vsel %vm130, %v234, 0
    %v243 = vsel %vm130, %v235, 0
    %245 = vmatpush.msra.mxu0 0.0
    %246 = vmatpush.msra.mxu0 0.0
    %247 = vmatpush.msra.mxu0 0.0
    %248 = vmatpush.msra.mxu0 0.0
    %249 = vmatpush.msra.mxu0 0.0
    %250 = vmatpush.msra.mxu0 0.0
    %251 = vmatpush.msra.mxu0 0.0
    %252 = vmatpush.msra.mxu0 0.0
    %253 = vmatpush.msra.mxu0 0.0
    %254 = vmatpush.msra.mxu0 0.0
    %255 = vmatpush.msra.mxu0 0.0
    %256 = vmatpush.msra.mxu0 0.0
    %257 = vmatpush.msra.mxu0 0.0
    %258 = vmatpush.msra.mxu0 %v230
    %259 = vmatpush.msra.mxu0 %v227
    %260 = vmatpush.msra.mxu0 %v224
    %261 = vmatmul.f32.gmra.mxu0 %v237
    %v262 = vpop.f32.mrf.mxu0
    %v263 = vadd.f32 0.0, %v262
    %264 = vmatmul.f32.gmra.mxu0 %v240
    %v265 = vpop.f32.mrf.mxu0
    %v266 = vadd.f32 0.0, %v265
    %267 = vmatmul.f32.gmra.mxu0 %v243
    %v268 = vpop.f32.mrf.mxu0
    %v269 = vadd.f32 0.0, %v268
    %270 = vdwg.mxu0
    %v271 = vadd.f32 %v193, %v263
    %v272 = vadd.f32 %v196, %v266
    %v273 = vadd.f32 %v199, %v269
    %s274 = scalar_lea.vmem %s3, 12
    %v275 = vld [vmem:[%s274] sm:$0x7]
    %v277 = vsel %vm62, %v275, 0
    %279 = vmatpush.msra.mxu0 0.0
    %280 = vmatpush.msra.mxu0 0.0
    %281 = vmatpush.msra.mxu0 0.0
    %282 = vmatpush.msra.mxu0 0.0
    %283 = vmatpush.msra.mxu0 0.0
    %284 = vmatpush.msra.mxu0 0.0
    %285 = vmatpush.msra.mxu0 0.0
    %286 = vmatpush.msra.mxu0 0.0
    %287 = vmatpush.msra.mxu0 0.0
    %288 = vmatpush.msra.mxu0 0.0
    %289 = vmatpush.msra.mxu0 0.0
    %290 = vmatpush.msra.mxu0 0.0
    %291 = vmatpush.msra.mxu0 0.0
    %292 = vmatpush.msra.mxu0 0.0
    %293 = vmatpush.msra.mxu0 0.0
    %294 = vmatpush.msra.mxu0 %v277
    %295 = vmatmul.f32.gmra.mxu0 %v54
    %v296 = vpop.f32.mrf.mxu0
    %v297 = vadd.f32 0.0, %v296
    %298 = vmatmul.f32.gmra.mxu0 %v57
    %v299 = vpop.f32.mrf.mxu0
    %v300 = vadd.f32 0.0, %v299
    %301 = vmatmul.f32.gmra.mxu0 %v60
    %v302 = vpop.f32.mrf.mxu0
    %v303 = vadd.f32 0.0, %v302
    %304 = vdwg.mxu0
    %s305 = scalar_lea.vmem %s1, 72
    %v306 = vld [vmem:[%s305] sm:$0xff]
    %v307 = vld [vmem:[%s305 + $0x8] sm:$0xff]
    %v308 = vld [vmem:[%s305 + $0x10] sm:$0xff]
    %v310 = vsel %vm130, %v306, 0
    %v313 = vsel %vm130, %v307, 0
    %v316 = vsel %vm130, %v308, 0
    %318 = vmatpush.msra.mxu0 0.0
    %319 = vmatpush.msra.mxu0 0.0
    %320 = vmatpush.msra.mxu0 0.0
    %321 = vmatpush.msra.mxu0 0.0
    %322 = vmatpush.msra.mxu0 0.0
    %323 = vmatpush.msra.mxu0 0.0
    %324 = vmatpush.msra.mxu0 0.0
    %325 = vmatpush.msra.mxu0 0.0
    %326 = vmatpush.msra.mxu0 0.0
    %327 = vmatpush.msra.mxu0 0.0
    %328 = vmatpush.msra.mxu0 0.0
    %329 = vmatpush.msra.mxu0 0.0
    %330 = vmatpush.msra.mxu0 0.0
    %331 = vmatpush.msra.mxu0 %v303
    %332 = vmatpush.msra.mxu0 %v300
    %333 = vmatpush.msra.mxu0 %v297
    %334 = vmatmul.f32.gmra.mxu0 %v310
    %v335 = vpop.f32.mrf.mxu0
    %v336 = vadd.f32 0.0, %v335
    %337 = vmatmul.f32.gmra.mxu0 %v313
    %v338 = vpop.f32.mrf.mxu0
    %v339 = vadd.f32 0.0, %v338
    %340 = vmatmul.f32.gmra.mxu0 %v316
    %v341 = vpop.f32.mrf.mxu0
    %v342 = vadd.f32 0.0, %v341
    %343 = vdwg.mxu0
    %v344 = vadd.f32 %v271, %v336
    %v345 = vadd.f32 %v272, %v339
    %v346 = vadd.f32 %v273, %v342
    %s347 = scalar_lea.vmem %s3, 16
    %v348 = vld [vmem:[%s347] sm:$0x7]
    %v350 = vsel %vm62, %v348, 0
    %352 = vmatpush.msra.mxu0 0.0
    %353 = vmatpush.msra.mxu0 0.0
    %354 = vmatpush.msra.mxu0 0.0
    %355 = vmatpush.msra.mxu0 0.0
    %356 = vmatpush.msra.mxu0 0.0
    %357 = vmatpush.msra.mxu0 0.0
    %358 = vmatpush.msra.mxu0 0.0
    %359 = vmatpush.msra.mxu0 0.0
    %360 = vmatpush.msra.mxu0 0.0
    %361 = vmatpush.msra.mxu0 0.0
    %362 = vmatpush.msra.mxu0 0.0
    %363 = vmatpush.msra.mxu0 0.0
    %364 = vmatpush.msra.mxu0 0.0
    %365 = vmatpush.msra.mxu0 0.0
    %366 = vmatpush.msra.mxu0 0.0
    %367 = vmatpush.msra.mxu0 %v350
    %368 = vmatmul.f32.gmra.mxu0 %v54
    %v369 = vpop.f32.mrf.mxu0
    %v370 = vadd.f32 0.0, %v369
    %371 = vmatmul.f32.gmra.mxu0 %v57
    %v372 = vpop.f32.mrf.mxu0
    %v373 = vadd.f32 0.0, %v372
    %374 = vmatmul.f32.gmra.mxu0 %v60
    %v375 = vpop.f32.mrf.mxu0
    %v376 = vadd.f32 0.0, %v375
    %377 = vdwg.mxu0
    %s378 = scalar_lea.vmem %s1, 96
    %v379 = vld [vmem:[%s378] sm:$0xff]
    %v380 = vld [vmem:[%s378 + $0x8] sm:$0xff]
    %v381 = vld [vmem:[%s378 + $0x10] sm:$0xff]
    %v383 = vsel %vm130, %v379, 0
    %v386 = vsel %vm130, %v380, 0
    %v389 = vsel %vm130, %v381, 0
    %391 = vmatpush.msra.mxu0 0.0
    %392 = vmatpush.msra.mxu0 0.0
    %393 = vmatpush.msra.mxu0 0.0
    %394 = vmatpush.msra.mxu0 0.0
    %395 = vmatpush.msra.mxu0 0.0
    %396 = vmatpush.msra.mxu0 0.0
    %397 = vmatpush.msra.mxu0 0.0
    %398 = vmatpush.msra.mxu0 0.0
    %399 = vmatpush.msra.mxu0 0.0
    %400 = vmatpush.msra.mxu0 0.0
    %401 = vmatpush.msra.mxu0 0.0
    %402 = vmatpush.msra.mxu0 0.0
    %403 = vmatpush.msra.mxu0 0.0
    %404 = vmatpush.msra.mxu0 %v376
    %405 = vmatpush.msra.mxu0 %v373
    %406 = vmatpush.msra.mxu0 %v370
    %407 = vmatmul.f32.gmra.mxu0 %v383
    %v408 = vpop.f32.mrf.mxu0
    %v409 = vadd.f32 0.0, %v408
    %410 = vmatmul.f32.gmra.mxu0 %v386
    %v411 = vpop.f32.mrf.mxu0
    %v412 = vadd.f32 0.0, %v411
    %413 = vmatmul.f32.gmra.mxu0 %v389
    %v414 = vpop.f32.mrf.mxu0
    %v415 = vadd.f32 0.0, %v414
    %416 = vdwg.mxu0
    %v417 = vadd.f32 %v344, %v409
    %v418 = vadd.f32 %v345, %v412
    %v419 = vadd.f32 %v346, %v415
    %s420 = scalar_lea.vmem %s3, 20
    %v421 = vld [vmem:[%s420] sm:$0x7]
    %v423 = vsel %vm62, %v421, 0
    %425 = vmatpush.msra.mxu0 0.0
    %426 = vmatpush.msra.mxu0 0.0
    %427 = vmatpush.msra.mxu0 0.0
    %428 = vmatpush.msra.mxu0 0.0
    %429 = vmatpush.msra.mxu0 0.0
    %430 = vmatpush.msra.mxu0 0.0
    %431 = vmatpush.msra.mxu0 0.0
    %432 = vmatpush.msra.mxu0 0.0
    %433 = vmatpush.msra.mxu0 0.0
    %434 = vmatpush.msra.mxu0 0.0
    %435 = vmatpush.msra.mxu0 0.0
    %436 = vmatpush.msra.mxu0 0.0
    %437 = vmatpush.msra.mxu0 0.0
    %438 = vmatpush.msra.mxu0 0.0
    %439 = vmatpush.msra.mxu0 0.0
    %440 = vmatpush.msra.mxu0 %v423
    %441 = vmatmul.f32.gmra.mxu0 %v54
    %v442 = vpop.f32.mrf.mxu0
    %v443 = vadd.f32 0.0, %v442
    %444 = vmatmul.f32.gmra.mxu0 %v57
    %v445 = vpop.f32.mrf.mxu0
    %v446 = vadd.f32 0.0, %v445
    %447 = vmatmul.f32.gmra.mxu0 %v60
    %v448 = vpop.f32.mrf.mxu0
    %v449 = vadd.f32 0.0, %v448
    %450 = vdwg.mxu0
    %s451 = scalar_lea.vmem %s1, 120
    %v452 = vld [vmem:[%s451] sm:$0xff]
    %v453 = vld [vmem:[%s451 + $0x8] sm:$0xff]
    %v454 = vld [vmem:[%s451 + $0x10] sm:$0xff]
    %v456 = vsel %vm130, %v452, 0
    %v459 = vsel %vm130, %v453, 0
    %v462 = vsel %vm130, %v454, 0
    %464 = vmatpush.msra.mxu0 0.0
    %465 = vmatpush.msra.mxu0 0.0
    %466 = vmatpush.msra.mxu0 0.0
    %467 = vmatpush.msra.mxu0 0.0
    %468 = vmatpush.msra.mxu0 0.0
    %469 = vmatpush.msra.mxu0 0.0
    %470 = vmatpush.msra.mxu0 0.0
    %471 = vmatpush.msra.mxu0 0.0
    %472 = vmatpush.msra.mxu0 0.0
    %473 = vmatpush.msra.mxu0 0.0
    %474 = vmatpush.msra.mxu0 0.0
    %475 = vmatpush.msra.mxu0 0.0
    %476 = vmatpush.msra.mxu0 0.0
    %477 = vmatpush.msra.mxu0 %v449
    %478 = vmatpush.msra.mxu0 %v446
    %479 = vmatpush.msra.mxu0 %v443
    %480 = vmatmul.f32.gmra.mxu0 %v456
    %v481 = vpop.f32.mrf.mxu0
    %v482 = vadd.f32 0.0, %v481
    %483 = vmatmul.f32.gmra.mxu0 %v459
    %v484 = vpop.f32.mrf.mxu0
    %v485 = vadd.f32 0.0, %v484
    %486 = vmatmul.f32.gmra.mxu0 %v462
    %v487 = vpop.f32.mrf.mxu0
    %v488 = vadd.f32 0.0, %v487
    %489 = vdwg.mxu0
    %v490 = vadd.f32 %v417, %v482
    %v491 = vadd.f32 %v418, %v485
    %v492 = vadd.f32 %v419, %v488
    %s493 = scalar_lea.vmem %s3, 24
    %v494 = vld [vmem:[%s493] sm:$0x7]
    %v496 = vsel %vm62, %v494, 0
    %498 = vmatpush.msra.mxu0 0.0
    %499 = vmatpush.msra.mxu0 0.0
    %500 = vmatpush.msra.mxu0 0.0
    %501 = vmatpush.msra.mxu0 0.0
    %502 = vmatpush.msra.mxu0 0.0
    %503 = vmatpush.msra.mxu0 0.0
    %504 = vmatpush.msra.mxu0 0.0
    %505 = vmatpush.msra.mxu0 0.0
    %506 = vmatpush.msra.mxu0 0.0
    %507 = vmatpush.msra.mxu0 0.0
    %508 = vmatpush.msra.mxu0 0.0
    %509 = vmatpush.msra.mxu0 0.0
    %510 = vmatpush.msra.mxu0 0.0
    %511 = vmatpush.msra.mxu0 0.0
    %512 = vmatpush.msra.mxu0 0.0
    %513 = vmatpush.msra.mxu0 %v496
    %514 = vmatmul.f32.gmra.mxu0 %v54
    %v515 = vpop.f32.mrf.mxu0
    %v516 = vadd.f32 0.0, %v515
    %517 = vmatmul.f32.gmra.mxu0 %v57
    %v518 = vpop.f32.mrf.mxu0
    %v519 = vadd.f32 0.0, %v518
    %520 = vmatmul.f32.gmra.mxu0 %v60
    %v521 = vpop.f32.mrf.mxu0
    %v522 = vadd.f32 0.0, %v521
    %523 = vdwg.mxu0
    %s524 = scalar_lea.vmem %s1, 144
    %v525 = vld [vmem:[%s524] sm:$0xff]
    %v526 = vld [vmem:[%s524 + $0x8] sm:$0xff]
    %v527 = vld [vmem:[%s524 + $0x10] sm:$0xff]
    %v529 = vsel %vm130, %v525, 0
    %v532 = vsel %vm130, %v526, 0
    %v535 = vsel %vm130, %v527, 0
    %537 = vmatpush.msra.mxu0 0.0
    %538 = vmatpush.msra.mxu0 0.0
    %539 = vmatpush.msra.mxu0 0.0
    %540 = vmatpush.msra.mxu0 0.0
    %541 = vmatpush.msra.mxu0 0.0
    %542 = vmatpush.msra.mxu0 0.0
    %543 = vmatpush.msra.mxu0 0.0
    %544 = vmatpush.msra.mxu0 0.0
    %545 = vmatpush.msra.mxu0 0.0
    %546 = vmatpush.msra.mxu0 0.0
    %547 = vmatpush.msra.mxu0 0.0
    %548 = vmatpush.msra.mxu0 0.0
    %549 = vmatpush.msra.mxu0 0.0
    %550 = vmatpush.msra.mxu0 %v522
    %551 = vmatpush.msra.mxu0 %v519
    %552 = vmatpush.msra.mxu0 %v516
    %553 = vmatmul.f32.gmra.mxu0 %v529
    %v554 = vpop.f32.mrf.mxu0
    %v555 = vadd.f32 0.0, %v554
    %556 = vmatmul.f32.gmra.mxu0 %v532
    %v557 = vpop.f32.mrf.mxu0
    %v558 = vadd.f32 0.0, %v557
    %559 = vmatmul.f32.gmra.mxu0 %v535
    %v560 = vpop.f32.mrf.mxu0
    %v561 = vadd.f32 0.0, %v560
    %562 = vdwg.mxu0
    %v563 = vadd.f32 %v490, %v555
    %v564 = vadd.f32 %v491, %v558
    %v565 = vadd.f32 %v492, %v561
    %s566 = scalar_lea.vmem %s3, 28
    %v567 = vld [vmem:[%s566] sm:$0x7]
    %v569 = vsel %vm62, %v567, 0
    %571 = vmatpush.msra.mxu0 0.0
    %572 = vmatpush.msra.mxu0 0.0
    %573 = vmatpush.msra.mxu0 0.0
    %574 = vmatpush.msra.mxu0 0.0
    %575 = vmatpush.msra.mxu0 0.0
    %576 = vmatpush.msra.mxu0 0.0
    %577 = vmatpush.msra.mxu0 0.0
    %578 = vmatpush.msra.mxu0 0.0
    %579 = vmatpush.msra.mxu0 0.0
    %580 = vmatpush.msra.mxu0 0.0
    %581 = vmatpush.msra.mxu0 0.0
    %582 = vmatpush.msra.mxu0 0.0
    %583 = vmatpush.msra.mxu0 0.0
    %584 = vmatpush.msra.mxu0 0.0
    %585 = vmatpush.msra.mxu0 0.0
    %586 = vmatpush.msra.mxu0 %v569
    %587 = vmatmul.f32.gmra.mxu0 %v54
    %v588 = vpop.f32.mrf.mxu0
    %v589 = vadd.f32 0.0, %v588
    %590 = vmatmul.f32.gmra.mxu0 %v57
    %v591 = vpop.f32.mrf.mxu0
    %v592 = vadd.f32 0.0, %v591
    %593 = vmatmul.f32.gmra.mxu0 %v60
    %v594 = vpop.f32.mrf.mxu0
    %v595 = vadd.f32 0.0, %v594
    %596 = vdwg.mxu0
    %s597 = scalar_lea.vmem %s1, 168
    %v598 = vld [vmem:[%s597] sm:$0xff]
    %v599 = vld [vmem:[%s597 + $0x8] sm:$0xff]
    %v600 = vld [vmem:[%s597 + $0x10] sm:$0xff]
    %v602 = vsel %vm130, %v598, 0
    %v605 = vsel %vm130, %v599, 0
    %v608 = vsel %vm130, %v600, 0
    %610 = vmatpush.msra.mxu0 0.0
    %611 = vmatpush.msra.mxu0 0.0
    %612 = vmatpush.msra.mxu0 0.0
    %613 = vmatpush.msra.mxu0 0.0
    %614 = vmatpush.msra.mxu0 0.0
    %615 = vmatpush.msra.mxu0 0.0
    %616 = vmatpush.msra.mxu0 0.0
    %617 = vmatpush.msra.mxu0 0.0
    %618 = vmatpush.msra.mxu0 0.0
    %619 = vmatpush.msra.mxu0 0.0
    %620 = vmatpush.msra.mxu0 0.0
    %621 = vmatpush.msra.mxu0 0.0
    %622 = vmatpush.msra.mxu0 0.0
    %623 = vmatpush.msra.mxu0 %v595
    %624 = vmatpush.msra.mxu0 %v592
    %625 = vmatpush.msra.mxu0 %v589
    %626 = vmatmul.f32.gmra.mxu0 %v602
    %v627 = vpop.f32.mrf.mxu0
    %v628 = vadd.f32 0.0, %v627
    %629 = vmatmul.f32.gmra.mxu0 %v605
    %v630 = vpop.f32.mrf.mxu0
    %v631 = vadd.f32 0.0, %v630
    %632 = vmatmul.f32.gmra.mxu0 %v608
    %v633 = vpop.f32.mrf.mxu0
    %v634 = vadd.f32 0.0, %v633
    %635 = vdwg.mxu0
    %v636 = vadd.f32 %v563, %v628
    %v637 = vadd.f32 %v564, %v631
    %v638 = vadd.f32 %v565, %v634
    %s639 = scalar_lea.vmem %s3, 32
    %v640 = vld [vmem:[%s639] sm:$0x7]
    %v642 = vsel %vm62, %v640, 0
    %644 = vmatpush.msra.mxu0 0.0
    %645 = vmatpush.msra.mxu0 0.0
    %646 = vmatpush.msra.mxu0 0.0
    %647 = vmatpush.msra.mxu0 0.0
    %648 = vmatpush.msra.mxu0 0.0
    %649 = vmatpush.msra.mxu0 0.0
    %650 = vmatpush.msra.mxu0 0.0
    %651 = vmatpush.msra.mxu0 0.0
    %652 = vmatpush.msra.mxu0 0.0
    %653 = vmatpush.msra.mxu0 0.0
    %654 = vmatpush.msra.mxu0 0.0
    %655 = vmatpush.msra.mxu0 0.0
    %656 = vmatpush.msra.mxu0 0.0
    %657 = vmatpush.msra.mxu0 0.0
    %658 = vmatpush.msra.mxu0 0.0
    %659 = vmatpush.msra.mxu0 %v642
    %660 = vmatmul.f32.gmra.mxu0 %v54
    %v661 = vpop.f32.mrf.mxu0
    %v662 = vadd.f32 0.0, %v661
    %663 = vmatmul.f32.gmra.mxu0 %v57
    %v664 = vpop.f32.mrf.mxu0
    %v665 = vadd.f32 0.0, %v664
    %666 = vmatmul.f32.gmra.mxu0 %v60
    %v667 = vpop.f32.mrf.mxu0
    %v668 = vadd.f32 0.0, %v667
    %669 = vdwg.mxu0
    %s670 = scalar_lea.vmem %s1, 192
    %v671 = vld [vmem:[%s670] sm:$0xff]
    %v672 = vld [vmem:[%s670 + $0x8] sm:$0xff]
    %v673 = vld [vmem:[%s670 + $0x10] sm:$0xff]
    %v675 = vsel %vm130, %v671, 0
    %v678 = vsel %vm130, %v672, 0
    %v681 = vsel %vm130, %v673, 0
    %683 = vmatpush.msra.mxu0 0.0
    %684 = vmatpush.msra.mxu0 0.0
    %685 = vmatpush.msra.mxu0 0.0
    %686 = vmatpush.msra.mxu0 0.0
    %687 = vmatpush.msra.mxu0 0.0
    %688 = vmatpush.msra.mxu0 0.0
    %689 = vmatpush.msra.mxu0 0.0
    %690 = vmatpush.msra.mxu0 0.0
    %691 = vmatpush.msra.mxu0 0.0
    %692 = vmatpush.msra.mxu0 0.0
    %693 = vmatpush.msra.mxu0 0.0
    %694 = vmatpush.msra.mxu0 0.0
    %695 = vmatpush.msra.mxu0 0.0
    %696 = vmatpush.msra.mxu0 %v668
    %697 = vmatpush.msra.mxu0 %v665
    %698 = vmatpush.msra.mxu0 %v662
    %699 = vmatmul.f32.gmra.mxu0 %v675
    %v700 = vpop.f32.mrf.mxu0
    %v701 = vadd.f32 0.0, %v700
    %702 = vmatmul.f32.gmra.mxu0 %v678
    %v703 = vpop.f32.mrf.mxu0
    %v704 = vadd.f32 0.0, %v703
    %705 = vmatmul.f32.gmra.mxu0 %v681
    %v706 = vpop.f32.mrf.mxu0
    %v707 = vadd.f32 0.0, %v706
    %708 = vdwg.mxu0
    %v709 = vadd.f32 %v636, %v701
    %v710 = vadd.f32 %v637, %v704
    %v711 = vadd.f32 %v638, %v707
    %vm712 = vcmask 130048
    %v713 = vsel %vm712, %v709, 0.0
    %v714 = vsel %vm712, %v710, 0.0
    %v715 = vadd.f32 %v713, %v714
    %v716 = vsel %vm712, %v711, 0.0
    %v717 = vadd.f32 %v715, %v716
    %v718 = vrot.slane %v717, 4
    %v719 = vadd.f32 %v717, %v718
    %v720 = vrot.slane %v719, 2
    %v721 = vadd.f32 %v719, %v720
    %v722 = vrot.slane %v721, 1
    %v723 = vadd.f32 %v721, %v722
    %v724 = vmul.f32 %v723, 0.055555556
    %v725 = vsub.f32 %v709, %v724
    %v726 = vsub.f32 %v710, %v724
    %v727 = vsub.f32 %v711, %v724
    %v728 = vmul.f32 %v725, %v43
    %v729 = vmul.f32 %v726, %v44
    %v730 = vmul.f32 %v727, %v45
    %v731 = vmul.f32 %v728, %v728
    %v732 = vmul.f32 %v729, %v729
    %v733 = vmul.f32 %v730, %v730
    %v734 = vsel %vm712, %v731, 0.0
    %v735 = vsel %vm712, %v732, 0.0
    %v736 = vadd.f32 %v734, %v735
    %v737 = vsel %vm712, %v733, 0.0
    %v738 = vadd.f32 %v736, %v737
    %v739 = vrot.slane %v738, 4
    %v740 = vadd.f32 %v738, %v739
    %v741 = vrot.slane %v740, 2
    %v742 = vadd.f32 %v740, %v741
    %v743 = vrot.slane %v742, 1
    %v744 = vadd.f32 %v742, %v743
    %v745 = vmul.f32 %v744, 0.055555556
    %v746 = vadd.f32 %v745, 1e-05
    %v747 = vrsqrt.pop %v746
    %v748 = vmul.f32 %v747, %v746
    %v749 = vmul.f32 %v748, %v747
    %v750 = vmul.f32 0.5, %v749
    %v751 = vsub.f32 1.5, %v750
    %v752 = vmul.f32 %v747, %v751
    %vm753 = vweird.f32 %v746
    %vm754 = vweird.f32 %v747
    %vm755 = vmor %vm753, %vm754
    %v756 = vsel %vm755, %v747, %v752
    %v757 = vmul.f32 %v728, %v756
    %v758 = vmul.f32 %v729, %v756
    %v759 = vmul.f32 %v730, %v756
    %v760 = vperm.slane %v49, 0
    %v761 = vmul.f32 %v760, %v757
    %v762 = vmul.f32 %v760, %v758
    %v763 = vmul.f32 %v760, %v759
    %v764 = vperm.slane %v50, 0
    %v765 = vadd.f32 %v761, %v764
    %v766 = vadd.f32 %v762, %v764
    %v767 = vadd.f32 %v763, %v764
    %v768 = vmax.f32 %v765, 0.0
    %v769 = vmax.f32 %v766, 0.0
    %v770 = vmax.f32 %v767, 0.0
    %v771 = vmul.f32 %v768, %v43
    %v772 = vmul.f32 %v769, %v44
    %v773 = vmul.f32 %v770, %v45
    %v774 = vld [vmem:[%s7 + $0x2] sm:$0x1]
    %v775 = vld [vmem:[%s7 + $0x3] sm:$0x1]
    %v776 = vld [vmem:[%s4] sm:$0xff]
    %v777 = vld [vmem:[%s4 + $0x8] sm:$0xff]
    %v779 = vsel %vm712, %v771, 0
    %v782 = vsel %vm712, %v772, 0
    %v785 = vsel %vm712, %v773, 0
    %787 = vmatpush.msra.mxu0 0.0
    %788 = vmatpush.msra.mxu0 0.0
    %789 = vmatpush.msra.mxu0 0.0
    %790 = vmatpush.msra.mxu0 0.0
    %791 = vmatpush.msra.mxu0 0.0
    %792 = vmatpush.msra.mxu0 0.0
    %793 = vmatpush.msra.mxu0 0.0
    %794 = vmatpush.msra.mxu0 0.0
    %795 = vmatpush.msra.mxu0 0.0
    %796 = vmatpush.msra.mxu0 0.0
    %797 = vmatpush.msra.mxu0 0.0
    %798 = vmatpush.msra.mxu0 0.0
    %799 = vmatpush.msra.mxu0 0.0
    %800 = vmatpush.msra.mxu0 0.0
    %801 = vmatpush.msra.mxu0 %v777
    %802 = vmatpush.msra.mxu0 %v776
    %803 = vmatmul.f32.gmra.mxu0 %v779
    %v804 = vpop.f32.mrf.mxu0
    %v805 = vadd.f32 0.0, %v804
    %806 = vmatmul.f32.gmra.mxu0 %v782
    %v807 = vpop.f32.mrf.mxu0
    %v808 = vadd.f32 0.0, %v807
    %809 = vmatmul.f32.gmra.mxu0 %v785
    %v810 = vpop.f32.mrf.mxu0
    %v811 = vadd.f32 0.0, %v810
    %812 = vdwg.mxu0
    %s813 = scalar_lea.vmem %s4, 16
    %v814 = vld [vmem:[%s813] sm:$0xff]
    %v815 = vld [vmem:[%s813 + $0x8] sm:$0xff]
    %816 = vmatpush.msra.mxu0 0.0
    %817 = vmatpush.msra.mxu0 0.0
    %818 = vmatpush.msra.mxu0 0.0
    %819 = vmatpush.msra.mxu0 0.0
    %820 = vmatpush.msra.mxu0 0.0
    %821 = vmatpush.msra.mxu0 0.0
    %822 = vmatpush.msra.mxu0 0.0
    %823 = vmatpush.msra.mxu0 0.0
    %824 = vmatpush.msra.mxu0 0.0
    %825 = vmatpush.msra.mxu0 0.0
    %826 = vmatpush.msra.mxu0 0.0
    %827 = vmatpush.msra.mxu0 0.0
    %828 = vmatpush.msra.mxu0 0.0
    %829 = vmatpush.msra.mxu0 0.0
    %830 = vmatpush.msra.mxu0 %v815
    %831 = vmatpush.msra.mxu0 %v814
    %832 = vmatmul.f32.gmra.mxu0 %v779
    %v833 = vpop.f32.mrf.mxu0
    %v834 = vadd.f32 0.0, %v833
    %835 = vmatmul.f32.gmra.mxu0 %v782
    %v836 = vpop.f32.mrf.mxu0
    %v837 = vadd.f32 0.0, %v836
    %838 = vmatmul.f32.gmra.mxu0 %v785
    %v839 = vpop.f32.mrf.mxu0
    %v840 = vadd.f32 0.0, %v839
    %841 = vdwg.mxu0
    %842 = vmatpush.msra.mxu0 0.0
    %843 = vmatpush.msra.mxu0 0.0
    %844 = vmatpush.msra.mxu0 0.0
    %845 = vmatpush.msra.mxu0 0.0
    %846 = vmatpush.msra.mxu0 0.0
    %847 = vmatpush.msra.mxu0 0.0
    %848 = vmatpush.msra.mxu0 0.0
    %849 = vmatpush.msra.mxu0 0.0
    %850 = vmatpush.msra.mxu0 0.0
    %851 = vmatpush.msra.mxu0 0.0
    %852 = vmatpush.msra.mxu0 0.0
    %853 = vmatpush.msra.mxu0 0.0
    %854 = vmatpush.msra.mxu0 0.0
    %855 = vmatpush.msra.mxu0 %v840
    %856 = vmatpush.msra.mxu0 %v837
    %857 = vmatpush.msra.mxu0 %v834
    %858 = vmatmul.f32.gmra.mxu0 %v132
    %v859 = vpop.f32.mrf.mxu0
    %v860 = vadd.f32 0.0, %v859
    %861 = vmatmul.f32.gmra.mxu0 %v135
    %v862 = vpop.f32.mrf.mxu0
    %v863 = vadd.f32 0.0, %v862
    %864 = vmatmul.f32.gmra.mxu0 %v138
    %v865 = vpop.f32.mrf.mxu0
    %v866 = vadd.f32 0.0, %v865
    %867 = vdwg.mxu0
    %868 = vmatpush.msra.mxu0 0.0
    %869 = vmatpush.msra.mxu0 0.0
    %870 = vmatpush.msra.mxu0 0.0
    %871 = vmatpush.msra.mxu0 0.0
    %872 = vmatpush.msra.mxu0 0.0
    %873 = vmatpush.msra.mxu0 0.0
    %874 = vmatpush.msra.mxu0 0.0
    %875 = vmatpush.msra.mxu0 0.0
    %876 = vmatpush.msra.mxu0 0.0
    %877 = vmatpush.msra.mxu0 0.0
    %878 = vmatpush.msra.mxu0 0.0
    %879 = vmatpush.msra.mxu0 0.0
    %880 = vmatpush.msra.mxu0 0.0
    %881 = vmatpush.msra.mxu0 %v811
    %882 = vmatpush.msra.mxu0 %v808
    %883 = vmatpush.msra.mxu0 %v805
    %884 = vmatmul.f32.gmra.mxu0 %v167
    %v885 = vpop.f32.mrf.mxu0
    %v886 = vadd.f32 %v860, %v885
    %887 = vmatmul.f32.gmra.mxu0 %v170
    %v888 = vpop.f32.mrf.mxu0
    %v889 = vadd.f32 %v863, %v888
    %890 = vmatmul.f32.gmra.mxu0 %v173
    %v891 = vpop.f32.mrf.mxu0
    %v892 = vadd.f32 %v866, %v891
    %893 = vdwg.mxu0
    %s894 = scalar_lea.vmem %s4, 32
    %v895 = vld [vmem:[%s894] sm:$0xff]
    %v896 = vld [vmem:[%s894 + $0x8] sm:$0xff]
    %897 = vmatpush.msra.mxu0 0.0
    %898 = vmatpush.msra.mxu0 0.0
    %899 = vmatpush.msra.mxu0 0.0
    %900 = vmatpush.msra.mxu0 0.0
    %901 = vmatpush.msra.mxu0 0.0
    %902 = vmatpush.msra.mxu0 0.0
    %903 = vmatpush.msra.mxu0 0.0
    %904 = vmatpush.msra.mxu0 0.0
    %905 = vmatpush.msra.mxu0 0.0
    %906 = vmatpush.msra.mxu0 0.0
    %907 = vmatpush.msra.mxu0 0.0
    %908 = vmatpush.msra.mxu0 0.0
    %909 = vmatpush.msra.mxu0 0.0
    %910 = vmatpush.msra.mxu0 0.0
    %911 = vmatpush.msra.mxu0 %v896
    %912 = vmatpush.msra.mxu0 %v895
    %913 = vmatmul.f32.gmra.mxu0 %v779
    %v914 = vpop.f32.mrf.mxu0
    %v915 = vadd.f32 0.0, %v914
    %916 = vmatmul.f32.gmra.mxu0 %v782
    %v917 = vpop.f32.mrf.mxu0
    %v918 = vadd.f32 0.0, %v917
    %919 = vmatmul.f32.gmra.mxu0 %v785
    %v920 = vpop.f32.mrf.mxu0
    %v921 = vadd.f32 0.0, %v920
    %922 = vdwg.mxu0
    %923 = vmatpush.msra.mxu0 0.0
    %924 = vmatpush.msra.mxu0 0.0
    %925 = vmatpush.msra.mxu0 0.0
    %926 = vmatpush.msra.mxu0 0.0
    %927 = vmatpush.msra.mxu0 0.0
    %928 = vmatpush.msra.mxu0 0.0
    %929 = vmatpush.msra.mxu0 0.0
    %930 = vmatpush.msra.mxu0 0.0
    %931 = vmatpush.msra.mxu0 0.0
    %932 = vmatpush.msra.mxu0 0.0
    %933 = vmatpush.msra.mxu0 0.0
    %934 = vmatpush.msra.mxu0 0.0
    %935 = vmatpush.msra.mxu0 0.0
    %936 = vmatpush.msra.mxu0 %v921
    %937 = vmatpush.msra.mxu0 %v918
    %938 = vmatpush.msra.mxu0 %v915
    %939 = vmatmul.f32.gmra.mxu0 %v237
    %v940 = vpop.f32.mrf.mxu0
    %v941 = vadd.f32 0.0, %v940
    %942 = vmatmul.f32.gmra.mxu0 %v240
    %v943 = vpop.f32.mrf.mxu0
    %v944 = vadd.f32 0.0, %v943
    %945 = vmatmul.f32.gmra.mxu0 %v243
    %v946 = vpop.f32.mrf.mxu0
    %v947 = vadd.f32 0.0, %v946
    %948 = vdwg.mxu0
    %v949 = vadd.f32 %v886, %v941
    %v950 = vadd.f32 %v889, %v944
    %v951 = vadd.f32 %v892, %v947
    %s952 = scalar_lea.vmem %s4, 48
    %v953 = vld [vmem:[%s952] sm:$0xff]
    %v954 = vld [vmem:[%s952 + $0x8] sm:$0xff]
    %955 = vmatpush.msra.mxu0 0.0
    %956 = vmatpush.msra.mxu0 0.0
    %957 = vmatpush.msra.mxu0 0.0
    %958 = vmatpush.msra.mxu0 0.0
    %959 = vmatpush.msra.mxu0 0.0
    %960 = vmatpush.msra.mxu0 0.0
    %961 = vmatpush.msra.mxu0 0.0
    %962 = vmatpush.msra.mxu0 0.0
    %963 = vmatpush.msra.mxu0 0.0
    %964 = vmatpush.msra.mxu0 0.0
    %965 = vmatpush.msra.mxu0 0.0
    %966 = vmatpush.msra.mxu0 0.0
    %967 = vmatpush.msra.mxu0 0.0
    %968 = vmatpush.msra.mxu0 0.0
    %969 = vmatpush.msra.mxu0 %v954
    %970 = vmatpush.msra.mxu0 %v953
    %971 = vmatmul.f32.gmra.mxu0 %v779
    %v972 = vpop.f32.mrf.mxu0
    %v973 = vadd.f32 0.0, %v972
    %974 = vmatmul.f32.gmra.mxu0 %v782
    %v975 = vpop.f32.mrf.mxu0
    %v976 = vadd.f32 0.0, %v975
    %977 = vmatmul.f32.gmra.mxu0 %v785
    %v978 = vpop.f32.mrf.mxu0
    %v979 = vadd.f32 0.0, %v978
    %980 = vdwg.mxu0
    %981 = vmatpush.msra.mxu0 0.0
    %982 = vmatpush.msra.mxu0 0.0
    %983 = vmatpush.msra.mxu0 0.0
    %984 = vmatpush.msra.mxu0 0.0
    %985 = vmatpush.msra.mxu0 0.0
    %986 = vmatpush.msra.mxu0 0.0
    %987 = vmatpush.msra.mxu0 0.0
    %988 = vmatpush.msra.mxu0 0.0
    %989 = vmatpush.msra.mxu0 0.0
    %990 = vmatpush.msra.mxu0 0.0
    %991 = vmatpush.msra.mxu0 0.0
    %992 = vmatpush.msra.mxu0 0.0
    %993 = vmatpush.msra.mxu0 0.0
    %994 = vmatpush.msra.mxu0 %v979
    %995 = vmatpush.msra.mxu0 %v976
    %996 = vmatpush.msra.mxu0 %v973
    %997 = vmatmul.f32.gmra.mxu0 %v310
    %v998 = vpop.f32.mrf.mxu0
    %v999 = vadd.f32 0.0, %v998
    %1000 = vmatmul.f32.gmra.mxu0 %v313
    %v1001 = vpop.f32.mrf.mxu0
    %v1002 = vadd.f32 0.0, %v1001
    %1003 = vmatmul.f32.gmra.mxu0 %v316
    %v1004 = vpop.f32.mrf.mxu0
    %v1005 = vadd.f32 0.0, %v1004
    %1006 = vdwg.mxu0
    %v1007 = vadd.f32 %v949, %v999
    %v1008 = vadd.f32 %v950, %v1002
    %v1009 = vadd.f32 %v951, %v1005
    %s1010 = scalar_lea.vmem %s4, 64
    %v1011 = vld [vmem:[%s1010] sm:$0xff]
    %v1012 = vld [vmem:[%s1010 + $0x8] sm:$0xff]
    %1013 = vmatpush.msra.mxu0 0.0
    %1014 = vmatpush.msra.mxu0 0.0
    %1015 = vmatpush.msra.mxu0 0.0
    %1016 = vmatpush.msra.mxu0 0.0
    %1017 = vmatpush.msra.mxu0 0.0
    %1018 = vmatpush.msra.mxu0 0.0
    %1019 = vmatpush.msra.mxu0 0.0
    %1020 = vmatpush.msra.mxu0 0.0
    %1021 = vmatpush.msra.mxu0 0.0
    %1022 = vmatpush.msra.mxu0 0.0
    %1023 = vmatpush.msra.mxu0 0.0
    %1024 = vmatpush.msra.mxu0 0.0
    %1025 = vmatpush.msra.mxu0 0.0
    %1026 = vmatpush.msra.mxu0 0.0
    %1027 = vmatpush.msra.mxu0 %v1012
    %1028 = vmatpush.msra.mxu0 %v1011
    %1029 = vmatmul.f32.gmra.mxu0 %v779
    %v1030 = vpop.f32.mrf.mxu0
    %v1031 = vadd.f32 0.0, %v1030
    %1032 = vmatmul.f32.gmra.mxu0 %v782
    %v1033 = vpop.f32.mrf.mxu0
    %v1034 = vadd.f32 0.0, %v1033
    %1035 = vmatmul.f32.gmra.mxu0 %v785
    %v1036 = vpop.f32.mrf.mxu0
    %v1037 = vadd.f32 0.0, %v1036
    %1038 = vdwg.mxu0
    %1039 = vmatpush.msra.mxu0 0.0
    %1040 = vmatpush.msra.mxu0 0.0
    %1041 = vmatpush.msra.mxu0 0.0
    %1042 = vmatpush.msra.mxu0 0.0
    %1043 = vmatpush.msra.mxu0 0.0
    %1044 = vmatpush.msra.mxu0 0.0
    %1045 = vmatpush.msra.mxu0 0.0
    %1046 = vmatpush.msra.mxu0 0.0
    %1047 = vmatpush.msra.mxu0 0.0
    %1048 = vmatpush.msra.mxu0 0.0
    %1049 = vmatpush.msra.mxu0 0.0
    %1050 = vmatpush.msra.mxu0 0.0
    %1051 = vmatpush.msra.mxu0 0.0
    %1052 = vmatpush.msra.mxu0 %v1037
    %1053 = vmatpush.msra.mxu0 %v1034
    %1054 = vmatpush.msra.mxu0 %v1031
    %1055 = vmatmul.f32.gmra.mxu0 %v383
    %v1056 = vpop.f32.mrf.mxu0
    %v1057 = vadd.f32 0.0, %v1056
    %1058 = vmatmul.f32.gmra.mxu0 %v386
    %v1059 = vpop.f32.mrf.mxu0
    %v1060 = vadd.f32 0.0, %v1059
    %1061 = vmatmul.f32.gmra.mxu0 %v389
    %v1062 = vpop.f32.mrf.mxu0
    %v1063 = vadd.f32 0.0, %v1062
    %1064 = vdwg.mxu0
    %v1065 = vadd.f32 %v1007, %v1057
    %v1066 = vadd.f32 %v1008, %v1060
    %v1067 = vadd.f32 %v1009, %v1063
    %s1068 = scalar_lea.vmem %s4, 80
    %v1069 = vld [vmem:[%s1068] sm:$0xff]
    %v1070 = vld [vmem:[%s1068 + $0x8] sm:$0xff]
    %1071 = vmatpush.msra.mxu0 0.0
    %1072 = vmatpush.msra.mxu0 0.0
    %1073 = vmatpush.msra.mxu0 0.0
    %1074 = vmatpush.msra.mxu0 0.0
    %1075 = vmatpush.msra.mxu0 0.0
    %1076 = vmatpush.msra.mxu0 0.0
    %1077 = vmatpush.msra.mxu0 0.0
    %1078 = vmatpush.msra.mxu0 0.0
    %1079 = vmatpush.msra.mxu0 0.0
    %1080 = vmatpush.msra.mxu0 0.0
    %1081 = vmatpush.msra.mxu0 0.0
    %1082 = vmatpush.msra.mxu0 0.0
    %1083 = vmatpush.msra.mxu0 0.0
    %1084 = vmatpush.msra.mxu0 0.0
    %1085 = vmatpush.msra.mxu0 %v1070
    %1086 = vmatpush.msra.mxu0 %v1069
    %1087 = vmatmul.f32.gmra.mxu0 %v779
    %v1088 = vpop.f32.mrf.mxu0
    %v1089 = vadd.f32 0.0, %v1088
    %1090 = vmatmul.f32.gmra.mxu0 %v782
    %v1091 = vpop.f32.mrf.mxu0
    %v1092 = vadd.f32 0.0, %v1091
    %1093 = vmatmul.f32.gmra.mxu0 %v785
    %v1094 = vpop.f32.mrf.mxu0
    %v1095 = vadd.f32 0.0, %v1094
    %1096 = vdwg.mxu0
    %1097 = vmatpush.msra.mxu0 0.0
    %1098 = vmatpush.msra.mxu0 0.0
    %1099 = vmatpush.msra.mxu0 0.0
    %1100 = vmatpush.msra.mxu0 0.0
    %1101 = vmatpush.msra.mxu0 0.0
    %1102 = vmatpush.msra.mxu0 0.0
    %1103 = vmatpush.msra.mxu0 0.0
    %1104 = vmatpush.msra.mxu0 0.0
    %1105 = vmatpush.msra.mxu0 0.0
    %1106 = vmatpush.msra.mxu0 0.0
    %1107 = vmatpush.msra.mxu0 0.0
    %1108 = vmatpush.msra.mxu0 0.0
    %1109 = vmatpush.msra.mxu0 0.0
    %1110 = vmatpush.msra.mxu0 %v1095
    %1111 = vmatpush.msra.mxu0 %v1092
    %1112 = vmatpush.msra.mxu0 %v1089
    %1113 = vmatmul.f32.gmra.mxu0 %v456
    %v1114 = vpop.f32.mrf.mxu0
    %v1115 = vadd.f32 0.0, %v1114
    %1116 = vmatmul.f32.gmra.mxu0 %v459
    %v1117 = vpop.f32.mrf.mxu0
    %v1118 = vadd.f32 0.0, %v1117
    %1119 = vmatmul.f32.gmra.mxu0 %v462
    %v1120 = vpop.f32.mrf.mxu0
    %v1121 = vadd.f32 0.0, %v1120
    %1122 = vdwg.mxu0
    %v1123 = vadd.f32 %v1065, %v1115
    %v1124 = vadd.f32 %v1066, %v1118
    %v1125 = vadd.f32 %v1067, %v1121
    %s1126 = scalar_lea.vmem %s4, 96
    %v1127 = vld [vmem:[%s1126] sm:$0xff]
    %v1128 = vld [vmem:[%s1126 + $0x8] sm:$0xff]
    %1129 = vmatpush.msra.mxu0 0.0
    %1130 = vmatpush.msra.mxu0 0.0
    %1131 = vmatpush.msra.mxu0 0.0
    %1132 = vmatpush.msra.mxu0 0.0
    %1133 = vmatpush.msra.mxu0 0.0
    %1134 = vmatpush.msra.mxu0 0.0
    %1135 = vmatpush.msra.mxu0 0.0
    %1136 = vmatpush.msra.mxu0 0.0
    %1137 = vmatpush.msra.mxu0 0.0
    %1138 = vmatpush.msra.mxu0 0.0
    %1139 = vmatpush.msra.mxu0 0.0
    %1140 = vmatpush.msra.mxu0 0.0
    %1141 = vmatpush.msra.mxu0 0.0
    %1142 = vmatpush.msra.mxu0 0.0
    %1143 = vmatpush.msra.mxu0 %v1128
    %1144 = vmatpush.msra.mxu0 %v1127
    %1145 = vmatmul.f32.gmra.mxu0 %v779
    %v1146 = vpop.f32.mrf.mxu0
    %v1147 = vadd.f32 0.0, %v1146
    %1148 = vmatmul.f32.gmra.mxu0 %v782
    %v1149 = vpop.f32.mrf.mxu0
    %v1150 = vadd.f32 0.0, %v1149
    %1151 = vmatmul.f32.gmra.mxu0 %v785
    %v1152 = vpop.f32.mrf.mxu0
    %v1153 = vadd.f32 0.0, %v1152
    %1154 = vdwg.mxu0
    %1155 = vmatpush.msra.mxu0 0.0
    %1156 = vmatpush.msra.mxu0 0.0
    %1157 = vmatpush.msra.mxu0 0.0
    %1158 = vmatpush.msra.mxu0 0.0
    %1159 = vmatpush.msra.mxu0 0.0
    %1160 = vmatpush.msra.mxu0 0.0
    %1161 = vmatpush.msra.mxu0 0.0
    %1162 = vmatpush.msra.mxu0 0.0
    %1163 = vmatpush.msra.mxu0 0.0
    %1164 = vmatpush.msra.mxu0 0.0
    %1165 = vmatpush.msra.mxu0 0.0
    %1166 = vmatpush.msra.mxu0 0.0
    %1167 = vmatpush.msra.mxu0 0.0
    %1168 = vmatpush.msra.mxu0 %v1153
    %1169 = vmatpush.msra.mxu0 %v1150
    %1170 = vmatpush.msra.mxu0 %v1147
    %1171 = vmatmul.f32.gmra.mxu0 %v529
    %v1172 = vpop.f32.mrf.mxu0
    %v1173 = vadd.f32 0.0, %v1172
    %1174 = vmatmul.f32.gmra.mxu0 %v532
    %v1175 = vpop.f32.mrf.mxu0
    %v1176 = vadd.f32 0.0, %v1175
    %1177 = vmatmul.f32.gmra.mxu0 %v535
    %v1178 = vpop.f32.mrf.mxu0
    %v1179 = vadd.f32 0.0, %v1178
    %1180 = vdwg.mxu0
    %v1181 = vadd.f32 %v1123, %v1173
    %v1182 = vadd.f32 %v1124, %v1176
    %v1183 = vadd.f32 %v1125, %v1179
    %s1184 = scalar_lea.vmem %s4, 112
    %v1185 = vld [vmem:[%s1184] sm:$0xff]
    %v1186 = vld [vmem:[%s1184 + $0x8] sm:$0xff]
    %1187 = vmatpush.msra.mxu0 0.0
    %1188 = vmatpush.msra.mxu0 0.0
    %1189 = vmatpush.msra.mxu0 0.0
    %1190 = vmatpush.msra.mxu0 0.0
    %1191 = vmatpush.msra.mxu0 0.0
    %1192 = vmatpush.msra.mxu0 0.0
    %1193 = vmatpush.msra.mxu0 0.0
    %1194 = vmatpush.msra.mxu0 0.0
    %1195 = vmatpush.msra.mxu0 0.0
    %1196 = vmatpush.msra.mxu0 0.0
    %1197 = vmatpush.msra.mxu0 0.0
    %1198 = vmatpush.msra.mxu0 0.0
    %1199 = vmatpush.msra.mxu0 0.0
    %1200 = vmatpush.msra.mxu0 0.0
    %1201 = vmatpush.msra.mxu0 %v1186
    %1202 = vmatpush.msra.mxu0 %v1185
    %1203 = vmatmul.f32.gmra.mxu0 %v779
    %v1204 = vpop.f32.mrf.mxu0
    %v1205 = vadd.f32 0.0, %v1204
    %1206 = vmatmul.f32.gmra.mxu0 %v782
    %v1207 = vpop.f32.mrf.mxu0
    %v1208 = vadd.f32 0.0, %v1207
    %1209 = vmatmul.f32.gmra.mxu0 %v785
    %v1210 = vpop.f32.mrf.mxu0
    %v1211 = vadd.f32 0.0, %v1210
    %1212 = vdwg.mxu0
    %1213 = vmatpush.msra.mxu0 0.0
    %1214 = vmatpush.msra.mxu0 0.0
    %1215 = vmatpush.msra.mxu0 0.0
    %1216 = vmatpush.msra.mxu0 0.0
    %1217 = vmatpush.msra.mxu0 0.0
    %1218 = vmatpush.msra.mxu0 0.0
    %1219 = vmatpush.msra.mxu0 0.0
    %1220 = vmatpush.msra.mxu0 0.0
    %1221 = vmatpush.msra.mxu0 0.0
    %1222 = vmatpush.msra.mxu0 0.0
    %1223 = vmatpush.msra.mxu0 0.0
    %1224 = vmatpush.msra.mxu0 0.0
    %1225 = vmatpush.msra.mxu0 0.0
    %1226 = vmatpush.msra.mxu0 %v1211
    %1227 = vmatpush.msra.mxu0 %v1208
    %1228 = vmatpush.msra.mxu0 %v1205
    %1229 = vmatmul.f32.gmra.mxu0 %v602
    %v1230 = vpop.f32.mrf.mxu0
    %v1231 = vadd.f32 0.0, %v1230
    %1232 = vmatmul.f32.gmra.mxu0 %v605
    %v1233 = vpop.f32.mrf.mxu0
    %v1234 = vadd.f32 0.0, %v1233
    %1235 = vmatmul.f32.gmra.mxu0 %v608
    %v1236 = vpop.f32.mrf.mxu0
    %v1237 = vadd.f32 0.0, %v1236
    %1238 = vdwg.mxu0
    %v1239 = vadd.f32 %v1181, %v1231
    %v1240 = vadd.f32 %v1182, %v1234
    %v1241 = vadd.f32 %v1183, %v1237
    %s1242 = scalar_lea.vmem %s4, 128
    %v1243 = vld [vmem:[%s1242] sm:$0xff]
    %v1244 = vld [vmem:[%s1242 + $0x8] sm:$0xff]
    %1245 = vmatpush.msra.mxu0 0.0
    %1246 = vmatpush.msra.mxu0 0.0
    %1247 = vmatpush.msra.mxu0 0.0
    %1248 = vmatpush.msra.mxu0 0.0
    %1249 = vmatpush.msra.mxu0 0.0
    %1250 = vmatpush.msra.mxu0 0.0
    %1251 = vmatpush.msra.mxu0 0.0
    %1252 = vmatpush.msra.mxu0 0.0
    %1253 = vmatpush.msra.mxu0 0.0
    %1254 = vmatpush.msra.mxu0 0.0
    %1255 = vmatpush.msra.mxu0 0.0
    %1256 = vmatpush.msra.mxu0 0.0
    %1257 = vmatpush.msra.mxu0 0.0
    %1258 = vmatpush.msra.mxu0 0.0
    %1259 = vmatpush.msra.mxu0 %v1244
    %1260 = vmatpush.msra.mxu0 %v1243
    %1261 = vmatmul.f32.gmra.mxu0 %v779
    %v1262 = vpop.f32.mrf.mxu0
    %v1263 = vadd.f32 0.0, %v1262
    %1264 = vmatmul.f32.gmra.mxu0 %v782
    %v1265 = vpop.f32.mrf.mxu0
    %v1266 = vadd.f32 0.0, %v1265
    %1267 = vmatmul.f32.gmra.mxu0 %v785
    %v1268 = vpop.f32.mrf.mxu0
    %v1269 = vadd.f32 0.0, %v1268
    %1270 = vdwg.mxu0
    %1271 = vmatpush.msra.mxu0 0.0
    %1272 = vmatpush.msra.mxu0 0.0
    %1273 = vmatpush.msra.mxu0 0.0
    %1274 = vmatpush.msra.mxu0 0.0
    %1275 = vmatpush.msra.mxu0 0.0
    %1276 = vmatpush.msra.mxu0 0.0
    %1277 = vmatpush.msra.mxu0 0.0
    %1278 = vmatpush.msra.mxu0 0.0
    %1279 = vmatpush.msra.mxu0 0.0
    %1280 = vmatpush.msra.mxu0 0.0
    %1281 = vmatpush.msra.mxu0 0.0
    %1282 = vmatpush.msra.mxu0 0.0
    %1283 = vmatpush.msra.mxu0 0.0
    %1284 = vmatpush.msra.mxu0 %v1269
    %1285 = vmatpush.msra.mxu0 %v1266
    %1286 = vmatpush.msra.mxu0 %v1263
    %1287 = vmatmul.f32.gmra.mxu0 %v675
    %v1288 = vpop.f32.mrf.mxu0
    %v1289 = vadd.f32 0.0, %v1288
    %1290 = vmatmul.f32.gmra.mxu0 %v678
    %v1291 = vpop.f32.mrf.mxu0
    %v1292 = vadd.f32 0.0, %v1291
    %1293 = vmatmul.f32.gmra.mxu0 %v681
    %v1294 = vpop.f32.mrf.mxu0
    %v1295 = vadd.f32 0.0, %v1294
    %1296 = vdwg.mxu0
    %v1297 = vadd.f32 %v1239, %v1289
    %v1298 = vadd.f32 %v1240, %v1292
    %v1299 = vadd.f32 %v1241, %v1295
    %vm1300 = vcmask 261120
    %v1301 = vsel %vm1300, %v1297, 0.0
    %v1302 = vsel %vm1300, %v1298, 0.0
    %v1303 = vadd.f32 %v1301, %v1302
    %v1304 = vsel %vm1300, %v1299, 0.0
    %v1305 = vadd.f32 %v1303, %v1304
    %v1306 = vrot.slane %v1305, 4
    %v1307 = vadd.f32 %v1305, %v1306
    %v1308 = vrot.slane %v1307, 2
    %v1309 = vadd.f32 %v1307, %v1308
    %v1310 = vrot.slane %v1309, 1
    %v1311 = vadd.f32 %v1309, %v1310
    %v1312 = vmul.f32 %v1311, 0.055555556
    %v1313 = vsub.f32 %v1297, %v1312
    %v1314 = vsub.f32 %v1298, %v1312
    %v1315 = vsub.f32 %v1299, %v1312
    %v1316 = vmul.f32 %v1313, %v43
    %v1317 = vmul.f32 %v1314, %v44
    %v1318 = vmul.f32 %v1315, %v45
    %v1319 = vmul.f32 %v1316, %v1316
    %v1320 = vmul.f32 %v1317, %v1317
    %v1321 = vmul.f32 %v1318, %v1318
    %v1322 = vsel %vm1300, %v1319, 0.0
    %v1323 = vsel %vm1300, %v1320, 0.0
    %v1324 = vadd.f32 %v1322, %v1323
    %v1325 = vsel %vm1300, %v1321, 0.0
    %v1326 = vadd.f32 %v1324, %v1325
    %v1327 = vrot.slane %v1326, 4
    %v1328 = vadd.f32 %v1326, %v1327
    %v1329 = vrot.slane %v1328, 2
    %v1330 = vadd.f32 %v1328, %v1329
    %v1331 = vrot.slane %v1330, 1
    %v1332 = vadd.f32 %v1330, %v1331
    %v1333 = vmul.f32 %v1332, 0.055555556
    %v1334 = vadd.f32 %v1333, 1e-05
    %v1335 = vrsqrt.pop %v1334
    %v1336 = vmul.f32 %v1335, %v1334
    %v1337 = vmul.f32 %v1336, %v1335
    %v1338 = vmul.f32 0.5, %v1337
    %v1339 = vsub.f32 1.5, %v1338
    %v1340 = vmul.f32 %v1335, %v1339
    %vm1341 = vweird.f32 %v1334
    %vm1342 = vweird.f32 %v1335
    %vm1343 = vmor %vm1341, %vm1342
    %v1344 = vsel %vm1343, %v1335, %v1340
    %v1345 = vmul.f32 %v1316, %v1344
    %v1346 = vmul.f32 %v1317, %v1344
    %v1347 = vmul.f32 %v1318, %v1344
    %v1348 = vperm.slane %v774, 0
    %v1349 = vmul.f32 %v1348, %v1345
    %v1350 = vmul.f32 %v1348, %v1346
    %v1351 = vmul.f32 %v1348, %v1347
    %v1352 = vperm.slane %v775, 0
    %v1353 = vadd.f32 %v1349, %v1352
    %v1354 = vadd.f32 %v1350, %v1352
    %v1355 = vadd.f32 %v1351, %v1352
    %v1356 = vmax.f32 %v1353, 0.0
    %v1357 = vmax.f32 %v1354, 0.0
    %v1358 = vmax.f32 %v1355, 0.0
    %v1359 = vmul.f32 %v1356, %v43
    %v1360 = vmul.f32 %v1357, %v44
    %v1361 = vmul.f32 %v1358, %v45
    %v1362 = vld [vmem:[%s2] sm:$0x3]
    %v1364 = vsel %vm130, %v1362, 0
    %1366 = vmatpush.msra.mxu0 0.0
    %1367 = vmatpush.msra.mxu0 0.0
    %1368 = vmatpush.msra.mxu0 0.0
    %1369 = vmatpush.msra.mxu0 0.0
    %1370 = vmatpush.msra.mxu0 0.0
    %1371 = vmatpush.msra.mxu0 0.0
    %1372 = vmatpush.msra.mxu0 0.0
    %1373 = vmatpush.msra.mxu0 0.0
    %1374 = vmatpush.msra.mxu0 0.0
    %1375 = vmatpush.msra.mxu0 0.0
    %1376 = vmatpush.msra.mxu0 0.0
    %1377 = vmatpush.msra.mxu0 0.0
    %1378 = vmatpush.msra.mxu0 0.0
    %1379 = vmatpush.msra.mxu0 %v1361
    %1380 = vmatpush.msra.mxu0 %v1360
    %1381 = vmatpush.msra.mxu0 %v1359
    %1382 = vmatmul.f32.gmra.mxu0 %v1364
    %v1383 = vpop.f32.mrf.mxu0
    %v1384 = vadd.f32 0.0, %v1383
    %1385 = vdwg.mxu0
    %v1386 = vld [vmem:[%s5] sm:$0xff]
    %v1387 = vld [vmem:[%s5 + $0x8] sm:$0xff]
    %v1388 = vld [vmem:[%s5 + $0x10] sm:$0xff]
    %v1389 = vld [vmem:[%s5 + $0x18] sm:$0xff]
    %s1390 = scalar_lea.vmem %s2, 2
    %v1391 = vld [vmem:[%s1390] sm:$0x3]
    %v1393 = vsel %vm130, %v1391, 0
    %1395 = vmatpush.msra.mxu0 0.0
    %1396 = vmatpush.msra.mxu0 0.0
    %1397 = vmatpush.msra.mxu0 0.0
    %1398 = vmatpush.msra.mxu0 0.0
    %1399 = vmatpush.msra.mxu0 0.0
    %1400 = vmatpush.msra.mxu0 0.0
    %1401 = vmatpush.msra.mxu0 0.0
    %1402 = vmatpush.msra.mxu0 0.0
    %1403 = vmatpush.msra.mxu0 0.0
    %1404 = vmatpush.msra.mxu0 0.0
    %1405 = vmatpush.msra.mxu0 0.0
    %1406 = vmatpush.msra.mxu0 0.0
    %1407 = vmatpush.msra.mxu0 0.0
    %1408 = vmatpush.msra.mxu0 %v1361
    %1409 = vmatpush.msra.mxu0 %v1360
    %1410 = vmatpush.msra.mxu0 %v1359
    %1411 = vmatmul.f32.gmra.mxu0 %v1393
    %v1412 = vpop.f32.mrf.mxu0
    %v1413 = vadd.f32 0.0, %v1412
    %1414 = vdwg.mxu0
    %s1415 = scalar_lea.vmem %s5, 32
    %v1416 = vld [vmem:[%s1415] sm:$0xff]
    %v1417 = vld [vmem:[%s1415 + $0x8] sm:$0xff]
    %v1418 = vld [vmem:[%s1415 + $0x10] sm:$0xff]
    %v1419 = vld [vmem:[%s1415 + $0x18] sm:$0xff]
    %v1421 = vsel %vm1300, %v1413, 0
    %1423 = vmatpush.msra.mxu0 0.0
    %1424 = vmatpush.msra.mxu0 0.0
    %1425 = vmatpush.msra.mxu0 0.0
    %1426 = vmatpush.msra.mxu0 0.0
    %1427 = vmatpush.msra.mxu0 0.0
    %1428 = vmatpush.msra.mxu0 0.0
    %1429 = vmatpush.msra.mxu0 0.0
    %1430 = vmatpush.msra.mxu0 0.0
    %1431 = vmatpush.msra.mxu0 0.0
    %1432 = vmatpush.msra.mxu0 0.0
    %1433 = vmatpush.msra.mxu0 0.0
    %1434 = vmatpush.msra.mxu0 0.0
    %1435 = vmatpush.msra.mxu0 %v1419
    %1436 = vmatpush.msra.mxu0 %v1418
    %1437 = vmatpush.msra.mxu0 %v1417
    %1438 = vmatpush.msra.mxu0 %v1416
    %1439 = vmatmul.f32.gmra.mxu0 %v1421
    %v1440 = vpop.f32.mrf.mxu0
    %v1441 = vadd.f32 0.0, %v1440
    %1442 = vdwg.mxu0
    %v1444 = vsel %vm1300, %v1384, 0
    %1446 = vmatpush.msra.mxu0 0.0
    %1447 = vmatpush.msra.mxu0 0.0
    %1448 = vmatpush.msra.mxu0 0.0
    %1449 = vmatpush.msra.mxu0 0.0
    %1450 = vmatpush.msra.mxu0 0.0
    %1451 = vmatpush.msra.mxu0 0.0
    %1452 = vmatpush.msra.mxu0 0.0
    %1453 = vmatpush.msra.mxu0 0.0
    %1454 = vmatpush.msra.mxu0 0.0
    %1455 = vmatpush.msra.mxu0 0.0
    %1456 = vmatpush.msra.mxu0 0.0
    %1457 = vmatpush.msra.mxu0 0.0
    %1458 = vmatpush.msra.mxu0 %v1389
    %1459 = vmatpush.msra.mxu0 %v1388
    %1460 = vmatpush.msra.mxu0 %v1387
    %1461 = vmatpush.msra.mxu0 %v1386
    %1462 = vmatmul.f32.gmra.mxu0 %v1444
    %v1463 = vpop.f32.mrf.mxu0
    %v1464 = vadd.f32 %v1441, %v1463
    %1465 = vdwg.mxu0
    %s1466 = scalar_lea.vmem %s2, 4
    %v1467 = vld [vmem:[%s1466] sm:$0x3]
    %v1469 = vsel %vm130, %v1467, 0
    %1471 = vmatpush.msra.mxu0 0.0
    %1472 = vmatpush.msra.mxu0 0.0
    %1473 = vmatpush.msra.mxu0 0.0
    %1474 = vmatpush.msra.mxu0 0.0
    %1475 = vmatpush.msra.mxu0 0.0
    %1476 = vmatpush.msra.mxu0 0.0
    %1477 = vmatpush.msra.mxu0 0.0
    %1478 = vmatpush.msra.mxu0 0.0
    %1479 = vmatpush.msra.mxu0 0.0
    %1480 = vmatpush.msra.mxu0 0.0
    %1481 = vmatpush.msra.mxu0 0.0
    %1482 = vmatpush.msra.mxu0 0.0
    %1483 = vmatpush.msra.mxu0 0.0
    %1484 = vmatpush.msra.mxu0 %v1361
    %1485 = vmatpush.msra.mxu0 %v1360
    %1486 = vmatpush.msra.mxu0 %v1359
    %1487 = vmatmul.f32.gmra.mxu0 %v1469
    %v1488 = vpop.f32.mrf.mxu0
    %v1489 = vadd.f32 0.0, %v1488
    %1490 = vdwg.mxu0
    %s1491 = scalar_lea.vmem %s5, 64
    %v1492 = vld [vmem:[%s1491] sm:$0xff]
    %v1493 = vld [vmem:[%s1491 + $0x8] sm:$0xff]
    %v1494 = vld [vmem:[%s1491 + $0x10] sm:$0xff]
    %v1495 = vld [vmem:[%s1491 + $0x18] sm:$0xff]
    %v1497 = vsel %vm1300, %v1489, 0
    %1499 = vmatpush.msra.mxu0 0.0
    %1500 = vmatpush.msra.mxu0 0.0
    %1501 = vmatpush.msra.mxu0 0.0
    %1502 = vmatpush.msra.mxu0 0.0
    %1503 = vmatpush.msra.mxu0 0.0
    %1504 = vmatpush.msra.mxu0 0.0
    %1505 = vmatpush.msra.mxu0 0.0
    %1506 = vmatpush.msra.mxu0 0.0
    %1507 = vmatpush.msra.mxu0 0.0
    %1508 = vmatpush.msra.mxu0 0.0
    %1509 = vmatpush.msra.mxu0 0.0
    %1510 = vmatpush.msra.mxu0 0.0
    %1511 = vmatpush.msra.mxu0 %v1495
    %1512 = vmatpush.msra.mxu0 %v1494
    %1513 = vmatpush.msra.mxu0 %v1493
    %1514 = vmatpush.msra.mxu0 %v1492
    %1515 = vmatmul.f32.gmra.mxu0 %v1497
    %v1516 = vpop.f32.mrf.mxu0
    %v1517 = vadd.f32 0.0, %v1516
    %1518 = vdwg.mxu0
    %v1519 = vadd.f32 %v1464, %v1517
    %s1520 = scalar_lea.vmem %s2, 6
    %v1521 = vld [vmem:[%s1520] sm:$0x3]
    %v1523 = vsel %vm130, %v1521, 0
    %1525 = vmatpush.msra.mxu0 0.0
    %1526 = vmatpush.msra.mxu0 0.0
    %1527 = vmatpush.msra.mxu0 0.0
    %1528 = vmatpush.msra.mxu0 0.0
    %1529 = vmatpush.msra.mxu0 0.0
    %1530 = vmatpush.msra.mxu0 0.0
    %1531 = vmatpush.msra.mxu0 0.0
    %1532 = vmatpush.msra.mxu0 0.0
    %1533 = vmatpush.msra.mxu0 0.0
    %1534 = vmatpush.msra.mxu0 0.0
    %1535 = vmatpush.msra.mxu0 0.0
    %1536 = vmatpush.msra.mxu0 0.0
    %1537 = vmatpush.msra.mxu0 0.0
    %1538 = vmatpush.msra.mxu0 %v1361
    %1539 = vmatpush.msra.mxu0 %v1360
    %1540 = vmatpush.msra.mxu0 %v1359
    %1541 = vmatmul.f32.gmra.mxu0 %v1523
    %v1542 = vpop.f32.mrf.mxu0
    %v1543 = vadd.f32 0.0, %v1542
    %1544 = vdwg.mxu0
    %s1545 = scalar_lea.vmem %s5, 96
    %v1546 = vld [vmem:[%s1545] sm:$0xff]
    %v1547 = vld [vmem:[%s1545 + $0x8] sm:$0xff]
    %v1548 = vld [vmem:[%s1545 + $0x10] sm:$0xff]
    %v1549 = vld [vmem:[%s1545 + $0x18] sm:$0xff]
    %v1551 = vsel %vm1300, %v1543, 0
    %1553 = vmatpush.msra.mxu0 0.0
    %1554 = vmatpush.msra.mxu0 0.0
    %1555 = vmatpush.msra.mxu0 0.0
    %1556 = vmatpush.msra.mxu0 0.0
    %1557 = vmatpush.msra.mxu0 0.0
    %1558 = vmatpush.msra.mxu0 0.0
    %1559 = vmatpush.msra.mxu0 0.0
    %1560 = vmatpush.msra.mxu0 0.0
    %1561 = vmatpush.msra.mxu0 0.0
    %1562 = vmatpush.msra.mxu0 0.0
    %1563 = vmatpush.msra.mxu0 0.0
    %1564 = vmatpush.msra.mxu0 0.0
    %1565 = vmatpush.msra.mxu0 %v1549
    %1566 = vmatpush.msra.mxu0 %v1548
    %1567 = vmatpush.msra.mxu0 %v1547
    %1568 = vmatpush.msra.mxu0 %v1546
    %1569 = vmatmul.f32.gmra.mxu0 %v1551
    %v1570 = vpop.f32.mrf.mxu0
    %v1571 = vadd.f32 0.0, %v1570
    %1572 = vdwg.mxu0
    %v1573 = vadd.f32 %v1519, %v1571
    %s1574 = scalar_lea.vmem %s2, 8
    %v1575 = vld [vmem:[%s1574] sm:$0x3]
    %v1577 = vsel %vm130, %v1575, 0
    %1579 = vmatpush.msra.mxu0 0.0
    %1580 = vmatpush.msra.mxu0 0.0
    %1581 = vmatpush.msra.mxu0 0.0
    %1582 = vmatpush.msra.mxu0 0.0
    %1583 = vmatpush.msra.mxu0 0.0
    %1584 = vmatpush.msra.mxu0 0.0
    %1585 = vmatpush.msra.mxu0 0.0
    %1586 = vmatpush.msra.mxu0 0.0
    %1587 = vmatpush.msra.mxu0 0.0
    %1588 = vmatpush.msra.mxu0 0.0
    %1589 = vmatpush.msra.mxu0 0.0
    %1590 = vmatpush.msra.mxu0 0.0
    %1591 = vmatpush.msra.mxu0 0.0
    %1592 = vmatpush.msra.mxu0 %v1361
    %1593 = vmatpush.msra.mxu0 %v1360
    %1594 = vmatpush.msra.mxu0 %v1359
    %1595 = vmatmul.f32.gmra.mxu0 %v1577
    %v1596 = vpop.f32.mrf.mxu0
    %v1597 = vadd.f32 0.0, %v1596
    %1598 = vdwg.mxu0
    %s1599 = scalar_lea.vmem %s5, 128
    %v1600 = vld [vmem:[%s1599] sm:$0xff]
    %v1601 = vld [vmem:[%s1599 + $0x8] sm:$0xff]
    %v1602 = vld [vmem:[%s1599 + $0x10] sm:$0xff]
    %v1603 = vld [vmem:[%s1599 + $0x18] sm:$0xff]
    %v1605 = vsel %vm1300, %v1597, 0
    %1607 = vmatpush.msra.mxu0 0.0
    %1608 = vmatpush.msra.mxu0 0.0
    %1609 = vmatpush.msra.mxu0 0.0
    %1610 = vmatpush.msra.mxu0 0.0
    %1611 = vmatpush.msra.mxu0 0.0
    %1612 = vmatpush.msra.mxu0 0.0
    %1613 = vmatpush.msra.mxu0 0.0
    %1614 = vmatpush.msra.mxu0 0.0
    %1615 = vmatpush.msra.mxu0 0.0
    %1616 = vmatpush.msra.mxu0 0.0
    %1617 = vmatpush.msra.mxu0 0.0
    %1618 = vmatpush.msra.mxu0 0.0
    %1619 = vmatpush.msra.mxu0 %v1603
    %1620 = vmatpush.msra.mxu0 %v1602
    %1621 = vmatpush.msra.mxu0 %v1601
    %1622 = vmatpush.msra.mxu0 %v1600
    %1623 = vmatmul.f32.gmra.mxu0 %v1605
    %v1624 = vpop.f32.mrf.mxu0
    %v1625 = vadd.f32 0.0, %v1624
    %1626 = vdwg.mxu0
    %v1627 = vadd.f32 %v1573, %v1625
    %s1628 = scalar_lea.vmem %s2, 10
    %v1629 = vld [vmem:[%s1628] sm:$0x3]
    %v1631 = vsel %vm130, %v1629, 0
    %1633 = vmatpush.msra.mxu0 0.0
    %1634 = vmatpush.msra.mxu0 0.0
    %1635 = vmatpush.msra.mxu0 0.0
    %1636 = vmatpush.msra.mxu0 0.0
    %1637 = vmatpush.msra.mxu0 0.0
    %1638 = vmatpush.msra.mxu0 0.0
    %1639 = vmatpush.msra.mxu0 0.0
    %1640 = vmatpush.msra.mxu0 0.0
    %1641 = vmatpush.msra.mxu0 0.0
    %1642 = vmatpush.msra.mxu0 0.0
    %1643 = vmatpush.msra.mxu0 0.0
    %1644 = vmatpush.msra.mxu0 0.0
    %1645 = vmatpush.msra.mxu0 0.0
    %1646 = vmatpush.msra.mxu0 %v1361
    %1647 = vmatpush.msra.mxu0 %v1360
    %1648 = vmatpush.msra.mxu0 %v1359
    %1649 = vmatmul.f32.gmra.mxu0 %v1631
    %v1650 = vpop.f32.mrf.mxu0
    %v1651 = vadd.f32 0.0, %v1650
    %1652 = vdwg.mxu0
    %s1653 = scalar_lea.vmem %s5, 160
    %v1654 = vld [vmem:[%s1653] sm:$0xff]
    %v1655 = vld [vmem:[%s1653 + $0x8] sm:$0xff]
    %v1656 = vld [vmem:[%s1653 + $0x10] sm:$0xff]
    %v1657 = vld [vmem:[%s1653 + $0x18] sm:$0xff]
    %v1659 = vsel %vm1300, %v1651, 0
    %1661 = vmatpush.msra.mxu0 0.0
    %1662 = vmatpush.msra.mxu0 0.0
    %1663 = vmatpush.msra.mxu0 0.0
    %1664 = vmatpush.msra.mxu0 0.0
    %1665 = vmatpush.msra.mxu0 0.0
    %1666 = vmatpush.msra.mxu0 0.0
    %1667 = vmatpush.msra.mxu0 0.0
    %1668 = vmatpush.msra.mxu0 0.0
    %1669 = vmatpush.msra.mxu0 0.0
    %1670 = vmatpush.msra.mxu0 0.0
    %1671 = vmatpush.msra.mxu0 0.0
    %1672 = vmatpush.msra.mxu0 0.0
    %1673 = vmatpush.msra.mxu0 %v1657
    %1674 = vmatpush.msra.mxu0 %v1656
    %1675 = vmatpush.msra.mxu0 %v1655
    %1676 = vmatpush.msra.mxu0 %v1654
    %1677 = vmatmul.f32.gmra.mxu0 %v1659
    %v1678 = vpop.f32.mrf.mxu0
    %v1679 = vadd.f32 0.0, %v1678
    %1680 = vdwg.mxu0
    %v1681 = vadd.f32 %v1627, %v1679
    %s1682 = scalar_lea.vmem %s2, 12
    %v1683 = vld [vmem:[%s1682] sm:$0x3]
    %v1685 = vsel %vm130, %v1683, 0
    %1687 = vmatpush.msra.mxu0 0.0
    %1688 = vmatpush.msra.mxu0 0.0
    %1689 = vmatpush.msra.mxu0 0.0
    %1690 = vmatpush.msra.mxu0 0.0
    %1691 = vmatpush.msra.mxu0 0.0
    %1692 = vmatpush.msra.mxu0 0.0
    %1693 = vmatpush.msra.mxu0 0.0
    %1694 = vmatpush.msra.mxu0 0.0
    %1695 = vmatpush.msra.mxu0 0.0
    %1696 = vmatpush.msra.mxu0 0.0
    %1697 = vmatpush.msra.mxu0 0.0
    %1698 = vmatpush.msra.mxu0 0.0
    %1699 = vmatpush.msra.mxu0 0.0
    %1700 = vmatpush.msra.mxu0 %v1361
    %1701 = vmatpush.msra.mxu0 %v1360
    %1702 = vmatpush.msra.mxu0 %v1359
    %1703 = vmatmul.f32.gmra.mxu0 %v1685
    %v1704 = vpop.f32.mrf.mxu0
    %v1705 = vadd.f32 0.0, %v1704
    %1706 = vdwg.mxu0
    %s1707 = scalar_lea.vmem %s5, 192
    %v1708 = vld [vmem:[%s1707] sm:$0xff]
    %v1709 = vld [vmem:[%s1707 + $0x8] sm:$0xff]
    %v1710 = vld [vmem:[%s1707 + $0x10] sm:$0xff]
    %v1711 = vld [vmem:[%s1707 + $0x18] sm:$0xff]
    %v1713 = vsel %vm1300, %v1705, 0
    %1715 = vmatpush.msra.mxu0 0.0
    %1716 = vmatpush.msra.mxu0 0.0
    %1717 = vmatpush.msra.mxu0 0.0
    %1718 = vmatpush.msra.mxu0 0.0
    %1719 = vmatpush.msra.mxu0 0.0
    %1720 = vmatpush.msra.mxu0 0.0
    %1721 = vmatpush.msra.mxu0 0.0
    %1722 = vmatpush.msra.mxu0 0.0
    %1723 = vmatpush.msra.mxu0 0.0
    %1724 = vmatpush.msra.mxu0 0.0
    %1725 = vmatpush.msra.mxu0 0.0
    %1726 = vmatpush.msra.mxu0 0.0
    %1727 = vmatpush.msra.mxu0 %v1711
    %1728 = vmatpush.msra.mxu0 %v1710
    %1729 = vmatpush.msra.mxu0 %v1709
    %1730 = vmatpush.msra.mxu0 %v1708
    %1731 = vmatmul.f32.gmra.mxu0 %v1713
    %v1732 = vpop.f32.mrf.mxu0
    %v1733 = vadd.f32 0.0, %v1732
    %1734 = vdwg.mxu0
    %v1735 = vadd.f32 %v1681, %v1733
    %s1736 = scalar_lea.vmem %s2, 14
    %v1737 = vld [vmem:[%s1736] sm:$0x3]
    %v1739 = vsel %vm130, %v1737, 0
    %1741 = vmatpush.msra.mxu0 0.0
    %1742 = vmatpush.msra.mxu0 0.0
    %1743 = vmatpush.msra.mxu0 0.0
    %1744 = vmatpush.msra.mxu0 0.0
    %1745 = vmatpush.msra.mxu0 0.0
    %1746 = vmatpush.msra.mxu0 0.0
    %1747 = vmatpush.msra.mxu0 0.0
    %1748 = vmatpush.msra.mxu0 0.0
    %1749 = vmatpush.msra.mxu0 0.0
    %1750 = vmatpush.msra.mxu0 0.0
    %1751 = vmatpush.msra.mxu0 0.0
    %1752 = vmatpush.msra.mxu0 0.0
    %1753 = vmatpush.msra.mxu0 0.0
    %1754 = vmatpush.msra.mxu0 %v1361
    %1755 = vmatpush.msra.mxu0 %v1360
    %1756 = vmatpush.msra.mxu0 %v1359
    %1757 = vmatmul.f32.gmra.mxu0 %v1739
    %v1758 = vpop.f32.mrf.mxu0
    %v1759 = vadd.f32 0.0, %v1758
    %1760 = vdwg.mxu0
    %s1761 = scalar_lea.vmem %s5, 224
    %v1762 = vld [vmem:[%s1761] sm:$0xff]
    %v1763 = vld [vmem:[%s1761 + $0x8] sm:$0xff]
    %v1764 = vld [vmem:[%s1761 + $0x10] sm:$0xff]
    %v1765 = vld [vmem:[%s1761 + $0x18] sm:$0xff]
    %v1767 = vsel %vm1300, %v1759, 0
    %1769 = vmatpush.msra.mxu0 0.0
    %1770 = vmatpush.msra.mxu0 0.0
    %1771 = vmatpush.msra.mxu0 0.0
    %1772 = vmatpush.msra.mxu0 0.0
    %1773 = vmatpush.msra.mxu0 0.0
    %1774 = vmatpush.msra.mxu0 0.0
    %1775 = vmatpush.msra.mxu0 0.0
    %1776 = vmatpush.msra.mxu0 0.0
    %1777 = vmatpush.msra.mxu0 0.0
    %1778 = vmatpush.msra.mxu0 0.0
    %1779 = vmatpush.msra.mxu0 0.0
    %1780 = vmatpush.msra.mxu0 0.0
    %1781 = vmatpush.msra.mxu0 %v1765
    %1782 = vmatpush.msra.mxu0 %v1764
    %1783 = vmatpush.msra.mxu0 %v1763
    %1784 = vmatpush.msra.mxu0 %v1762
    %1785 = vmatmul.f32.gmra.mxu0 %v1767
    %v1786 = vpop.f32.mrf.mxu0
    %v1787 = vadd.f32 0.0, %v1786
    %1788 = vdwg.mxu0
    %v1789 = vadd.f32 %v1735, %v1787
    %s1790 = scalar_lea.vmem %s2, 16
    %v1791 = vld [vmem:[%s1790] sm:$0x3]
    %v1793 = vsel %vm130, %v1791, 0
    %1795 = vmatpush.msra.mxu0 0.0
    %1796 = vmatpush.msra.mxu0 0.0
    %1797 = vmatpush.msra.mxu0 0.0
    %1798 = vmatpush.msra.mxu0 0.0
    %1799 = vmatpush.msra.mxu0 0.0
    %1800 = vmatpush.msra.mxu0 0.0
    %1801 = vmatpush.msra.mxu0 0.0
    %1802 = vmatpush.msra.mxu0 0.0
    %1803 = vmatpush.msra.mxu0 0.0
    %1804 = vmatpush.msra.mxu0 0.0
    %1805 = vmatpush.msra.mxu0 0.0
    %1806 = vmatpush.msra.mxu0 0.0
    %1807 = vmatpush.msra.mxu0 0.0
    %1808 = vmatpush.msra.mxu0 %v1361
    %1809 = vmatpush.msra.mxu0 %v1360
    %1810 = vmatpush.msra.mxu0 %v1359
    %1811 = vmatmul.f32.gmra.mxu0 %v1793
    %v1812 = vpop.f32.mrf.mxu0
    %v1813 = vadd.f32 0.0, %v1812
    %1814 = vdwg.mxu0
    %s1815 = scalar_lea.vmem %s5, 256
    %v1816 = vld [vmem:[%s1815] sm:$0xff]
    %v1817 = vld [vmem:[%s1815 + $0x8] sm:$0xff]
    %v1818 = vld [vmem:[%s1815 + $0x10] sm:$0xff]
    %v1819 = vld [vmem:[%s1815 + $0x18] sm:$0xff]
    %v1821 = vsel %vm1300, %v1813, 0
    %1823 = vmatpush.msra.mxu0 0.0
    %1824 = vmatpush.msra.mxu0 0.0
    %1825 = vmatpush.msra.mxu0 0.0
    %1826 = vmatpush.msra.mxu0 0.0
    %1827 = vmatpush.msra.mxu0 0.0
    %1828 = vmatpush.msra.mxu0 0.0
    %1829 = vmatpush.msra.mxu0 0.0
    %1830 = vmatpush.msra.mxu0 0.0
    %1831 = vmatpush.msra.mxu0 0.0
    %1832 = vmatpush.msra.mxu0 0.0
    %1833 = vmatpush.msra.mxu0 0.0
    %1834 = vmatpush.msra.mxu0 0.0
    %1835 = vmatpush.msra.mxu0 %v1819
    %1836 = vmatpush.msra.mxu0 %v1818
    %1837 = vmatpush.msra.mxu0 %v1817
    %1838 = vmatpush.msra.mxu0 %v1816
    %1839 = vmatmul.f32.gmra.mxu0 %v1821
    %v1840 = vpop.f32.mrf.mxu0
    %v1841 = vadd.f32 0.0, %v1840
    %1842 = vdwg.mxu0
    %v1843 = vadd.f32 %v1789, %v1841
    %v1844 = vld [vmem:[%s8] sm:$0x1]
    %v1845 = vperm.slane %v1844, 0
    %v1846 = vadd.f32 %v1843, %v1845
    %v1847 = vmax.f32 %v1846, 0.0
    %v1848 = vld [vmem:[%s6] sm:$0xff]
    %v1849 = vld [vmem:[%s6 + $0x8] sm:$0xff]
    %v1850 = vld [vmem:[%s6 + $0x10] sm:$0xff]
    %v1851 = vld [vmem:[%s6 + $0x18] sm:$0xff]
    %v1852 = vld [vmem:[%s6 + $0x20] sm:$0xff]
    %v1853 = vld [vmem:[%s6 + $0x28] sm:$0xff]
    %v1854 = vld [vmem:[%s6 + $0x30] sm:$0xff]
    %v1855 = vld [vmem:[%s6 + $0x38] sm:$0xff]
    %v1856 = vld [vmem:[%s8 + $0x1] sm:$0x1]
    %v1857 = vperm.slane %v1856, 0
    %vm1858 = vcmask 523264
    %v1860 = vsel %vm1858, %v1847, 0
    %1862 = vmatpush.msra.mxu0 0.0
    %1863 = vmatpush.msra.mxu0 0.0
    %1864 = vmatpush.msra.mxu0 0.0
    %1865 = vmatpush.msra.mxu0 0.0
    %1866 = vmatpush.msra.mxu0 0.0
    %1867 = vmatpush.msra.mxu0 0.0
    %1868 = vmatpush.msra.mxu0 0.0
    %1869 = vmatpush.msra.mxu0 0.0
    %1870 = vmatpush.msra.mxu0 %v1855
    %1871 = vmatpush.msra.mxu0 %v1854
    %1872 = vmatpush.msra.mxu0 %v1853
    %1873 = vmatpush.msra.mxu0 %v1852
    %1874 = vmatpush.msra.mxu0 %v1851
    %1875 = vmatpush.msra.mxu0 %v1850
    %1876 = vmatpush.msra.mxu0 %v1849
    %1877 = vmatpush.msra.mxu0 %v1848
    %1878 = vmatmul.f32.gmra.mxu0 %v1860
    %v1879 = vpop.f32.mrf.mxu0
    %v1880 = vadd.f32 %v1857, %v1879
    %1881 = vdwg.mxu0
    %1882 = vst [vmem:[#allocation2] sm:$0x3] %v1880
    // Predicated region
    $region38: #{cnn_forward.1} parent=1 // pred_check
      _
    $region39: #{cnn_forward.1} parent=1 // pred_check_branch
      %1884 = sbr.rel (0) target = $region41
    $region40: #{cnn_forward.1} parent=1 // pred_region
      %1886 = vsyncadd [#allocation3], 0
      %s1888 = sshll.u32 [#allocation2], 4
      %s1889 = int_to_ptr.vmem [resolvable:$true] %s1888
      %s1890 = sshll.u32 %s9, 4
      %s1891 = int_to_ptr.hbm [resolvable:$true] %s1890
      %1893 = dma.vmem_to_hbm [thread:$0]  %s1889, 32, %s1891, [#allocation3]
    $region41: #{cnn_forward.1} parent=1 // pred_fallthru
      _
    // Predicated region
    $region42: #{cnn_forward.1} parent=1 // pred_check
      _
    $region43: #{cnn_forward.1} parent=1 // pred_check_branch
      %1895 = sbr.rel (0) target = $region45
    $region44: #{cnn_forward.1} parent=1 // pred_region
      %1897 = dma.done [#allocation3], 32
    $region45: #{cnn_forward.1} parent=1 // pred_fallthru
      _
    %1898 = vsyncpa [#allocation3], 1

</llo_original>
